<compile_context>
chip_gen: v7x
topology: tpu7x:2x2x1
jax: 0.10.0
libtpu: 0.0.40
codegen_flags: <defaults>
</compile_context>

<pallas_src>
import functools

import jax
import jax.numpy as jnp
from jax.experimental import pallas as pl
from jax.experimental.pallas import tpu as pltpu


def _round_up(n, m):
    return ((n + m - 1) // m) * m


def _chip_vmem_limit_bytes():
    """~75% of physical VMEM (≈96 MiB v5e/v6e, ≈48 MiB v7x); fallback 64 MiB."""
    try:
        cap = int(pltpu.get_tpu_info().vmem_capacity_bytes)
        return max(32 * 1024 * 1024, int(0.75 * cap))
    except Exception:
        return 64 * 1024 * 1024


def _pick_batch_tile(B, batch_tile):
    """MXU-friendly 128-aligned batch tile with bounded padding waste."""
    batch_tile = max(128, _round_up(batch_tile, 128))
    tile = min(batch_tile, _round_up(B, 128))
    # Shrink (128 at a time) while batch-padding waste exceeds ~12.5% of B.
    while tile > 128 and (_round_up(B, tile) - B) > max(B // 8, 127):
        tile -= 128
    return tile


def _make_mlp_kernel(num_linear):
    """Fused MLP kernel. Ref order: x, w0, b0, ..., w{n-1}, b{n-1}, out.

    MXU matmuls with bf16 inputs and f32 accumulation; bias add / ReLU in f32
    on the VPU; activations recast to bf16 between layers.
    """

    def kernel(x_ref, *refs):
        o_ref = refs[-1]
        wb_refs = refs[:-1]
        h = x_ref[...]  # (tile, features) bf16
        for li in range(num_linear):
            w_ref = wb_refs[2 * li]
            b_ref = wb_refs[2 * li + 1]
            y = jnp.dot(h, w_ref[...], preferred_element_type=jnp.float32)
            y = y + b_ref[...]  # (1, out) broadcasts over rows; f32
            if li < num_linear - 1:
                y = jnp.maximum(y, 0.0)      # ReLU (+ Dropout = identity, eval)
                h = y.astype(jnp.bfloat16)   # back to bf16 for the next MXU pass
            else:
                o_ref[...] = y.astype(o_ref.dtype)

    return kernel


@functools.partial(jax.jit, static_argnames=("batch_tile", "vmem_limit_bytes"))
def bloom_mlp_forward(x, params, *, batch_tile=512, vmem_limit_bytes=None):
    """x: (B, input_dim). params: list of (W, b), W (in, out), b (1, out).
    Returns (B, num_two_grams) float32 matching the eval()-mode PyTorch MLP."""
    B, input_dim = x.shape
    num_linear = len(params)
    num_out = params[-1][0].shape[1]

    if vmem_limit_bytes is None:
        vmem_limit_bytes = _chip_vmem_limit_bytes()

    # ---- batch tiling: 128-aligned (MXU-friendly, bf16-safe), adaptive waste.
    tile = _pick_batch_tile(B, batch_tile)
    padded_B = _round_up(B, tile)

    # ---- bf16 inputs: 2x MXU rate, half the HBM traffic for x.
    xb = x.astype(jnp.bfloat16)
    if padded_B != B:
        xb = jnp.pad(xb, ((0, padded_B - B), (0, 0)))

    # ---- keep the output lane dimension a multiple of 128 (unmasked stores).
    padded_out = _round_up(num_out, 128)

    flat_args = []
    in_specs = [pl.BlockSpec((tile, input_dim), lambda i: (i, 0))]
    for li, (w, b) in enumerate(params):
        wb = w.astype(jnp.bfloat16)
        bf = b.astype(jnp.float32)
        if li == num_linear - 1 and padded_out != num_out:
            wb = jnp.pad(wb, ((0, 0), (0, padded_out - num_out)))
            bf = jnp.pad(bf, ((0, 0), (0, padded_out - num_out)))
        flat_args.append(wb)
        flat_args.append(bf)
        # Weights/biases are block-invariant across the batch grid (constant
        # index_map): single-buffer them — halves their VMEM footprint.
        in_specs.append(pl.BlockSpec(wb.shape, lambda i: (0, 0),
                                     pipeline_mode=pl.Buffered(1)))
        in_specs.append(pl.BlockSpec(bf.shape, lambda i: (0, 0),
                                     pipeline_mode=pl.Buffered(1)))

    out_spec = pl.BlockSpec((tile, padded_out), lambda i: (i, 0))

    # ---- advisory cost estimate for XLA's scheduler around the custom call.
    flops = 2 * padded_B * sum(int(flat_args[2 * li].shape[0]) *
                               int(flat_args[2 * li].shape[1])
                               for li in range(num_linear))
    bytes_accessed = (xb.size * 2 +
                      sum(int(a.size) * a.dtype.itemsize for a in flat_args) +
                      padded_B * padded_out * 4)
    cost = pl.CostEstimate(flops=flops, transcendentals=0,
                           bytes_accessed=bytes_accessed)

    out = pl.pallas_call(
        _make_mlp_kernel(num_linear),
        out_shape=jax.ShapeDtypeStruct((padded_B, padded_out), jnp.float32),
        grid_spec=pltpu.PrefetchScalarGridSpec(
            num_scalar_prefetch=0,
            grid=(padded_B // tile,),
            in_specs=in_specs,
            out_specs=out_spec,
        ),
        compiler_params=pltpu.CompilerParams(
            dimension_semantics=("parallel",),  # batch axis shards across TCs
            vmem_limit_bytes=vmem_limit_bytes,
        ),
        cost_estimate=cost,
    )(xb, *flat_args)

    return out[:B, :num_out]


def init_params(key, input_dim, num_two_grams, hidden_layer=256, num_layers=4):
    """Deterministic parameter init matching the PyTorch module's shapes.
    Weights stored as (in_features, out_features)."""
    dims = [input_dim] + [hidden_layer] * num_layers + [num_two_grams]
    params = []
    for li in range(len(dims) - 1):
        fan_in, fan_out = dims[li], dims[li + 1]
        key, kw, kb = jax.random.split(key, 3)
        bound = 1.0 / jnp.sqrt(fan_in)
        w = jax.random.uniform(kw, (fan_in, fan_out), jnp.float32, -bound, bound)
        b = jax.random.uniform(kb, (1, fan_out), jnp.float32, -bound, bound)
        params.append((w, b))
    return params


def reference_forward(x, params, *, bf16=False):
    """Pure-JAX reference. With bf16=True it mirrors the kernel's numerics
    (bf16 weights/activations, f32 accumulation)."""
    h = x.astype(jnp.bfloat16) if bf16 else x
    n = len(params)
    for i, (w, b) in enumerate(params):
        wd = w.astype(jnp.bfloat16) if bf16 else w
        y = jnp.dot(h, wd, preferred_element_type=jnp.float32) + b
        if i < n - 1:
            y = jnp.maximum(y, 0.0)
            h = y.astype(jnp.bfloat16) if bf16 else y
        else:
            h = y
    return h


if __name__ == "__main__":
    # Small, deterministic problem consistent with the module's forward:
    # one bloom-filter (0/1) vector of length input_dim per example.
    batch = 64
    input_dim = 512
    hidden_layer = 256
    num_layers = 4
    num_two_grams = 200  # not a multiple of 128 -> exercises output padding

    key = jax.random.PRNGKey(0)
    key, kx = jax.random.split(key)
    x = (jax.random.uniform(kx, (batch, input_dim)) < 0.3).astype(jnp.float32)

    params = init_params(key, input_dim, num_two_grams,
                         hidden_layer=hidden_layer, num_layers=num_layers)

    out = bloom_mlp_forward(x, params)
    out = jax.block_until_ready(out)

    ref_bf16 = reference_forward(x, params, bf16=True)
    assert out.shape == (batch, num_two_grams)
    assert jnp.allclose(out, ref_bf16, atol=2e-2, rtol=2e-2), \
        "mismatch vs bf16 reference"

    print("KERNEL_OK")
</pallas_src>

<mosaic_0001>
module attributes {stable_mosaic.version = 11 : i64} {
  func.func @kernel(%arg0: i32, %arg1: memref<128x512xbf16, #tpu.memory_space<vmem>>, %arg2: memref<512x256xbf16, #tpu.memory_space<vmem>>, %arg3: memref<1x256xf32, #tpu.memory_space<vmem>>, %arg4: memref<256x256xbf16, #tpu.memory_space<vmem>>, %arg5: memref<1x256xf32, #tpu.memory_space<vmem>>, %arg6: memref<256x256xbf16, #tpu.memory_space<vmem>>, %arg7: memref<1x256xf32, #tpu.memory_space<vmem>>, %arg8: memref<256x256xbf16, #tpu.memory_space<vmem>>, %arg9: memref<1x256xf32, #tpu.memory_space<vmem>>, %arg10: memref<256x256xbf16, #tpu.memory_space<vmem>>, %arg11: memref<1x256xf32, #tpu.memory_space<vmem>>, %arg12: memref<128x256xf32, #tpu.memory_space<vmem>>) attributes {dimension_semantics = [#tpu.dimension_semantics<parallel>], iteration_bounds = array<i64: 1>, scalar_prefetch = 0 : i64, scratch_operands = 0 : i64, tpu.core_type = #tpu.core_type<tc>, window_params = [{transform_indices = @transform_0, window_bounds = array<i64: 128, 512>}, {pipeline_mode = #tpu.pipeline_mode<synchronous>, transform_indices = @transform_1, window_bounds = array<i64: 512, 256>}, {pipeline_mode = #tpu.pipeline_mode<synchronous>, transform_indices = @transform_2, window_bounds = array<i64: 1, 256>}, {pipeline_mode = #tpu.pipeline_mode<synchronous>, transform_indices = @transform_3, window_bounds = array<i64: 256, 256>}, {pipeline_mode = #tpu.pipeline_mode<synchronous>, transform_indices = @transform_4, window_bounds = array<i64: 1, 256>}, {pipeline_mode = #tpu.pipeline_mode<synchronous>, transform_indices = @transform_5, window_bounds = array<i64: 256, 256>}, {pipeline_mode = #tpu.pipeline_mode<synchronous>, transform_indices = @transform_6, window_bounds = array<i64: 1, 256>}, {pipeline_mode = #tpu.pipeline_mode<synchronous>, transform_indices = @transform_7, window_bounds = array<i64: 256, 256>}, {pipeline_mode = #tpu.pipeline_mode<synchronous>, transform_indices = @transform_8, window_bounds = array<i64: 1, 256>}, {pipeline_mode = #tpu.pipeline_mode<synchronous>, transform_indices = @transform_9, window_bounds = array<i64: 256, 256>}, {pipeline_mode = #tpu.pipeline_mode<synchronous>, transform_indices = @transform_10, window_bounds = array<i64: 1, 256>}, {transform_indices = @transform_11, window_bounds = array<i64: 128, 256>}]} {
    %c0 = arith.constant 0 : index
    %c0_0 = arith.constant 0 : index
    %0 = vector.load %arg1[%c0, %c0_0] : memref<128x512xbf16, #tpu.memory_space<vmem>>, vector<128x512xbf16>
    %c0_1 = arith.constant 0 : index
    %c0_2 = arith.constant 0 : index
    %1 = vector.load %arg2[%c0_1, %c0_2] : memref<512x256xbf16, #tpu.memory_space<vmem>>, vector<512x256xbf16>
    %cst = arith.constant dense<0.000000e+00> : vector<128x256xf32>
    %2 = tpu.matmul %0, %1, %cst {dimension_numbers = #tpu.dot_dimension_numbers<[1], [0], [0], [1], [0, 0, 1, 1], [], []>} : vector<128x512xbf16>, vector<512x256xbf16>, vector<128x256xf32> -> vector<128x256xf32>
    %c0_3 = arith.constant 0 : index
    %c0_4 = arith.constant 0 : index
    %3 = vector.load %arg3[%c0_3, %c0_4] : memref<1x256xf32, #tpu.memory_space<vmem>>, vector<1x256xf32>
    %4 = vector.broadcast %3 : vector<1x256xf32> to vector<128x256xf32>
    %5 = arith.addf %2, %4 : vector<128x256xf32>
    %cst_5 = arith.constant 0.000000e+00 : f32
    %6 = vector.broadcast %cst_5 : f32 to vector<128x256xf32>
    %7 = arith.maximumf %5, %6 : vector<128x256xf32>
    %8 = arith.truncf %7 : vector<128x256xf32> to vector<128x256xbf16>
    %c0_6 = arith.constant 0 : index
    %c0_7 = arith.constant 0 : index
    %9 = vector.load %arg4[%c0_6, %c0_7] : memref<256x256xbf16, #tpu.memory_space<vmem>>, vector<256x256xbf16>
    %cst_8 = arith.constant dense<0.000000e+00> : vector<128x256xf32>
    %10 = tpu.matmul %8, %9, %cst_8 {dimension_numbers = #tpu.dot_dimension_numbers<[1], [0], [0], [1], [0, 0, 1, 1], [], []>} : vector<128x256xbf16>, vector<256x256xbf16>, vector<128x256xf32> -> vector<128x256xf32>
    %c0_9 = arith.constant 0 : index
    %c0_10 = arith.constant 0 : index
    %11 = vector.load %arg5[%c0_9, %c0_10] : memref<1x256xf32, #tpu.memory_space<vmem>>, vector<1x256xf32>
    %12 = vector.broadcast %11 : vector<1x256xf32> to vector<128x256xf32>
    %13 = arith.addf %10, %12 : vector<128x256xf32>
    %cst_11 = arith.constant 0.000000e+00 : f32
    %14 = vector.broadcast %cst_11 : f32 to vector<128x256xf32>
    %15 = arith.maximumf %13, %14 : vector<128x256xf32>
    %16 = arith.truncf %15 : vector<128x256xf32> to vector<128x256xbf16>
    %c0_12 = arith.constant 0 : index
    %c0_13 = arith.constant 0 : index
    %17 = vector.load %arg6[%c0_12, %c0_13] : memref<256x256xbf16, #tpu.memory_space<vmem>>, vector<256x256xbf16>
    %cst_14 = arith.constant dense<0.000000e+00> : vector<128x256xf32>
    %18 = tpu.matmul %16, %17, %cst_14 {dimension_numbers = #tpu.dot_dimension_numbers<[1], [0], [0], [1], [0, 0, 1, 1], [], []>} : vector<128x256xbf16>, vector<256x256xbf16>, vector<128x256xf32> -> vector<128x256xf32>
    %c0_15 = arith.constant 0 : index
    %c0_16 = arith.constant 0 : index
    %19 = vector.load %arg7[%c0_15, %c0_16] : memref<1x256xf32, #tpu.memory_space<vmem>>, vector<1x256xf32>
    %20 = vector.broadcast %19 : vector<1x256xf32> to vector<128x256xf32>
    %21 = arith.addf %18, %20 : vector<128x256xf32>
    %cst_17 = arith.constant 0.000000e+00 : f32
    %22 = vector.broadcast %cst_17 : f32 to vector<128x256xf32>
    %23 = arith.maximumf %21, %22 : vector<128x256xf32>
    %24 = arith.truncf %23 : vector<128x256xf32> to vector<128x256xbf16>
    %c0_18 = arith.constant 0 : index
    %c0_19 = arith.constant 0 : index
    %25 = vector.load %arg8[%c0_18, %c0_19] : memref<256x256xbf16, #tpu.memory_space<vmem>>, vector<256x256xbf16>
    %cst_20 = arith.constant dense<0.000000e+00> : vector<128x256xf32>
    %26 = tpu.matmul %24, %25, %cst_20 {dimension_numbers = #tpu.dot_dimension_numbers<[1], [0], [0], [1], [0, 0, 1, 1], [], []>} : vector<128x256xbf16>, vector<256x256xbf16>, vector<128x256xf32> -> vector<128x256xf32>
    %c0_21 = arith.constant 0 : index
    %c0_22 = arith.constant 0 : index
    %27 = vector.load %arg9[%c0_21, %c0_22] : memref<1x256xf32, #tpu.memory_space<vmem>>, vector<1x256xf32>
    %28 = vector.broadcast %27 : vector<1x256xf32> to vector<128x256xf32>
    %29 = arith.addf %26, %28 : vector<128x256xf32>
    %cst_23 = arith.constant 0.000000e+00 : f32
    %30 = vector.broadcast %cst_23 : f32 to vector<128x256xf32>
    %31 = arith.maximumf %29, %30 : vector<128x256xf32>
    %32 = arith.truncf %31 : vector<128x256xf32> to vector<128x256xbf16>
    %c0_24 = arith.constant 0 : index
    %c0_25 = arith.constant 0 : index
    %33 = vector.load %arg10[%c0_24, %c0_25] : memref<256x256xbf16, #tpu.memory_space<vmem>>, vector<256x256xbf16>
    %cst_26 = arith.constant dense<0.000000e+00> : vector<128x256xf32>
    %34 = tpu.matmul %32, %33, %cst_26 {dimension_numbers = #tpu.dot_dimension_numbers<[1], [0], [0], [1], [0, 0, 1, 1], [], []>} : vector<128x256xbf16>, vector<256x256xbf16>, vector<128x256xf32> -> vector<128x256xf32>
    %c0_27 = arith.constant 0 : index
    %c0_28 = arith.constant 0 : index
    %35 = vector.load %arg11[%c0_27, %c0_28] : memref<1x256xf32, #tpu.memory_space<vmem>>, vector<1x256xf32>
    %36 = vector.broadcast %35 : vector<1x256xf32> to vector<128x256xf32>
    %37 = arith.addf %34, %36 : vector<128x256xf32>
    %c0_29 = arith.constant 0 : index
    %c0_30 = arith.constant 0 : index
    %38 = vector.load %arg12[%c0_29, %c0_30] : memref<128x256xf32, #tpu.memory_space<vmem>>, vector<128x256xf32>
    tpu.vector_store %arg12[%c0_29, %c0_30], %37 {strides = array<i32>} : memref<128x256xf32, #tpu.memory_space<vmem>>, vector<128x256xf32>,
    return
  }
  func.func @transform_0(%arg0: i32) -> (i32, i32) {
    %c0_i32 = arith.constant 0 : i32
    %c0_i32_0 = arith.constant 0 : i32
    return %arg0, %c0_i32 : i32, i32
  }
  func.func @transform_1(%arg0: i32) -> (i32, i32) {
    %c0_i32 = arith.constant 0 : i32
    %c0_i32_0 = arith.constant 0 : i32
    %c0_i32_1 = arith.constant 0 : i32
    return %c0_i32, %c0_i32_0 : i32, i32
  }
  func.func @transform_2(%arg0: i32) -> (i32, i32) {
    %c0_i32 = arith.constant 0 : i32
    %c0_i32_0 = arith.constant 0 : i32
    %c0_i32_1 = arith.constant 0 : i32
    return %c0_i32, %c0_i32_0 : i32, i32
  }
  func.func @transform_3(%arg0: i32) -> (i32, i32) {
    %c0_i32 = arith.constant 0 : i32
    %c0_i32_0 = arith.constant 0 : i32
    %c0_i32_1 = arith.constant 0 : i32
    return %c0_i32, %c0_i32_0 : i32, i32
  }
  func.func @transform_4(%arg0: i32) -> (i32, i32) {
    %c0_i32 = arith.constant 0 : i32
    %c0_i32_0 = arith.constant 0 : i32
    %c0_i32_1 = arith.constant 0 : i32
    return %c0_i32, %c0_i32_0 : i32, i32
  }
  func.func @transform_5(%arg0: i32) -> (i32, i32) {
    %c0_i32 = arith.constant 0 : i32
    %c0_i32_0 = arith.constant 0 : i32
    %c0_i32_1 = arith.constant 0 : i32
    return %c0_i32, %c0_i32_0 : i32, i32
  }
  func.func @transform_6(%arg0: i32) -> (i32, i32) {
    %c0_i32 = arith.constant 0 : i32
    %c0_i32_0 = arith.constant 0 : i32
    %c0_i32_1 = arith.constant 0 : i32
    return %c0_i32, %c0_i32_0 : i32, i32
  }
  func.func @transform_7(%arg0: i32) -> (i32, i32) {
    %c0_i32 = arith.constant 0 : i32
    %c0_i32_0 = arith.constant 0 : i32
    %c0_i32_1 = arith.constant 0 : i32
    return %c0_i32, %c0_i32_0 : i32, i32
  }
  func.func @transform_8(%arg0: i32) -> (i32, i32) {
    %c0_i32 = arith.constant 0 : i32
    %c0_i32_0 = arith.constant 0 : i32
    %c0_i32_1 = arith.constant 0 : i32
    return %c0_i32, %c0_i32_0 : i32, i32
  }
  func.func @transform_9(%arg0: i32) -> (i32, i32) {
    %c0_i32 = arith.constant 0 : i32
    %c0_i32_0 = arith.constant 0 : i32
    %c0_i32_1 = arith.constant 0 : i32
    return %c0_i32, %c0_i32_0 : i32, i32
  }
  func.func @transform_10(%arg0: i32) -> (i32, i32) {
    %c0_i32 = arith.constant 0 : i32
    %c0_i32_0 = arith.constant 0 : i32
    %c0_i32_1 = arith.constant 0 : i32
    return %c0_i32, %c0_i32_0 : i32, i32
  }
  func.func @transform_11(%arg0: i32) -> (i32, i32) {
    %c0_i32 = arith.constant 0 : i32
    %c0_i32_0 = arith.constant 0 : i32
    return %arg0, %c0_i32 : i32, i32
  }
}

</mosaic_0001>

<llo_original>
// kernel: bloom_mlp_forward.1
$region0: #{bloom_mlp_forward.1}
  #allocation0 [shape = 'u32[]', space=smem, size = 0x4, offset = 0x4, fixed_abs, tag = 'smem constant byte address 0x4 - core index']
  #allocation1 [shape = 'u32[144,128]{1,0:T(1,128)}', space=vmem, size = 0x12000, scoped, tag = 'internal scratch']
  %s0 = inlined_call_operand.hbm [shape: bf16[128,512], index: 0, kind: input, shape index: {}]
  %s1 = inlined_call_operand.hbm [shape: bf16[512,256], index: 1, kind: input, shape index: {}]
  %s2 = inlined_call_operand.hbm [shape: f32[1,256], index: 2, kind: input, shape index: {}]
  %s3 = inlined_call_operand.hbm [shape: bf16[256,256], index: 3, kind: input, shape index: {}]
  %s4 = inlined_call_operand.hbm [shape: f32[1,256], index: 4, kind: input, shape index: {}]
  %s5 = inlined_call_operand.hbm [shape: bf16[256,256], index: 5, kind: input, shape index: {}]
  %s6 = inlined_call_operand.hbm [shape: f32[1,256], index: 6, kind: input, shape index: {}]
  %s7 = inlined_call_operand.hbm [shape: bf16[256,256], index: 7, kind: input, shape index: {}]
  %s8 = inlined_call_operand.hbm [shape: f32[1,256], index: 8, kind: input, shape index: {}]
  %s9 = inlined_call_operand.hbm [shape: bf16[256,256], index: 9, kind: input, shape index: {}]
  %s10 = inlined_call_operand.hbm [shape: f32[1,256], index: 10, kind: input, shape index: {}]
  %s11 = inlined_call_operand.hbm [shape: f32[128,256], index: 11, kind: output, shape index: {}]
  %s12 = sld [smem:[#allocation0]]
  $region98: #{bloom_mlp_forward.1} parent=0
    _
  %s14 = ssub.s32 1, %s12
  %s15 = scalar_select 0, %s14, %s12
  $region1: #{bloom_mlp_forward.1} parent=0
    #allocation2 [shape = 'u8[131072]{0}', space=vmem, size = 0x20000, scoped, tag = 'input window, operand 0, single buffered']
    #allocation3 [shape = 's32[1]{0}', space=sflag, size = 0x4, scoped, tag = 'scoped memory for bloom_mlp_forward.1']
    #allocation4 [shape = 's32[1]{0}', space=sflag, size = 0x4, scoped, tag = 'scoped memory for bloom_mlp_forward.1']
    #allocation5 [shape = 'u8[262144]{0}', space=vmem, size = 0x40000, scoped, tag = 'input window, operand 1, single buffered']
    #allocation6 [shape = 's32[1]{0}', space=sflag, size = 0x4, scoped, tag = 'scoped memory for bloom_mlp_forward.1']
    #allocation7 [shape = 'u8[1024]{0}', space=vmem, size = 0x400, scoped, tag = 'input window, operand 2, single buffered']
    #allocation8 [shape = 'u8[131072]{0}', space=vmem, size = 0x20000, scoped, tag = 'input window, operand 3, single buffered']
    #allocation9 [shape = 's32[1]{0}', space=sflag, size = 0x4, scoped, tag = 'scoped memory for bloom_mlp_forward.1']
    #allocation10 [shape = 'u8[1024]{0}', space=vmem, size = 0x400, scoped, tag = 'input window, operand 4, single buffered']
    #allocation11 [shape = 'u8[131072]{0}', space=vmem, size = 0x20000, scoped, tag = 'input window, operand 5, single buffered']
    #allocation12 [shape = 's32[1]{0}', space=sflag, size = 0x4, scoped, tag = 'scoped memory for bloom_mlp_forward.1']
    #allocation13 [shape = 'u8[1024]{0}', space=vmem, size = 0x400, scoped, tag = 'input window, operand 6, single buffered']
    #allocation14 [shape = 'u8[131072]{0}', space=vmem, size = 0x20000, scoped, tag = 'input window, operand 7, single buffered']
    #allocation15 [shape = 's32[1]{0}', space=sflag, size = 0x4, scoped, tag = 'scoped memory for bloom_mlp_forward.1']
    #allocation16 [shape = 'u8[1024]{0}', space=vmem, size = 0x400, scoped, tag = 'input window, operand 8, single buffered']
    #allocation17 [shape = 'u8[131072]{0}', space=vmem, size = 0x20000, scoped, tag = 'input window, operand 9, single buffered']
    #allocation18 [shape = 's32[1]{0}', space=sflag, size = 0x4, scoped, tag = 'scoped memory for bloom_mlp_forward.1']
    #allocation19 [shape = 'u8[1024]{0}', space=vmem, size = 0x400, scoped, tag = 'input window, operand 10, single buffered']
    #allocation20 [shape = 'u8[131072]{0}', space=vmem, size = 0x20000, scoped, tag = 'output window, operand 0, single buffered']
    %16 = vsyncpa [#allocation3], 0
    %17 = vsyncpa [#allocation6], 0
    %18 = vsyncpa [#allocation9], 0
    %19 = vsyncpa [#allocation12], 0
    %20 = vsyncpa [#allocation15], 0
    %21 = vsyncpa [#allocation18], 0
    %22 = vsyncpa [#allocation4], 0
    // Predicated region
    $region2: #{bloom_mlp_forward.1} parent=1 // pred_check
      _
    $region3: #{bloom_mlp_forward.1} parent=1 // pred_check_branch
      %24 = sbr.rel (0) target = $region5
    $region4: #{bloom_mlp_forward.1} parent=1 // pred_region
      %s26 = ssub.s32 4096, 4096
      %27 = vsyncadd [#allocation3], %s26
      %s28 = sshll.u32 [#allocation2], 4
      %s29 = int_to_ptr.vmem [resolvable:$true] %s28
      %34 = dma.hbm_to_vmem [thread:$0]  %s0, 4096, %s29, [#allocation3], 256, 256, 16
    $region5: #{bloom_mlp_forward.1} parent=1 // pred_fallthru
      _
    // Predicated region
    $region6: #{bloom_mlp_forward.1} parent=1 // pred_check
      _
    $region7: #{bloom_mlp_forward.1} parent=1 // pred_check_branch
      %36 = sbr.rel (0) target = $region9
    $region8: #{bloom_mlp_forward.1} parent=1 // pred_region
      %s38 = ssub.s32 8192, 8192
      %39 = vsyncadd [#allocation6], %s38
      %s40 = sshll.u32 [#allocation5], 4
      %s41 = int_to_ptr.vmem [resolvable:$true] %s40
      %46 = dma.hbm_to_vmem [thread:$0]  %s1, 8192, %s41, [#allocation6], 128, 128, 8
    $region9: #{bloom_mlp_forward.1} parent=1 // pred_fallthru
      _
    // Predicated region
    $region10: #{bloom_mlp_forward.1} parent=1 // pred_check
      _
    $region11: #{bloom_mlp_forward.1} parent=1 // pred_check_branch
      %48 = sbr.rel (0) target = $region13
    $region12: #{bloom_mlp_forward.1} parent=1 // pred_region
      %s50 = ssub.s32 32, 32
      %51 = vsyncadd [#allocation6], %s50
      %s53 = sshll.u32 [#allocation7], 4
      %s54 = int_to_ptr.vmem [resolvable:$true] %s53
      %56 = dma.hbm_to_vmem [thread:$0]  %s2, 32, %s54, [#allocation6]
    $region13: #{bloom_mlp_forward.1} parent=1 // pred_fallthru
      _
    // Predicated region
    $region14: #{bloom_mlp_forward.1} parent=1 // pred_check
      _
    $region15: #{bloom_mlp_forward.1} parent=1 // pred_check_branch
      %58 = sbr.rel (0) target = $region17
    $region16: #{bloom_mlp_forward.1} parent=1 // pred_region
      %s60 = ssub.s32 4096, 4096
      %61 = vsyncadd [#allocation9], %s60
      %s62 = sshll.u32 [#allocation8], 4
      %s63 = int_to_ptr.vmem [resolvable:$true] %s62
      %68 = dma.hbm_to_vmem [thread:$0]  %s3, 4096, %s63, [#allocation9], 128, 128, 8
    $region17: #{bloom_mlp_forward.1} parent=1 // pred_fallthru
      _
    // Predicated region
    $region18: #{bloom_mlp_forward.1} parent=1 // pred_check
      _
    $region19: #{bloom_mlp_forward.1} parent=1 // pred_check_branch
      %70 = sbr.rel (0) target = $region21
    $region20: #{bloom_mlp_forward.1} parent=1 // pred_region
      %s72 = ssub.s32 32, 32
      %73 = vsyncadd [#allocation9], %s72
      %s75 = sshll.u32 [#allocation10], 4
      %s76 = int_to_ptr.vmem [resolvable:$true] %s75
      %78 = dma.hbm_to_vmem [thread:$0]  %s4, 32, %s76, [#allocation9]
    $region21: #{bloom_mlp_forward.1} parent=1 // pred_fallthru
      _
    // Predicated region
    $region22: #{bloom_mlp_forward.1} parent=1 // pred_check
      _
    $region23: #{bloom_mlp_forward.1} parent=1 // pred_check_branch
      %80 = sbr.rel (0) target = $region25
    $region24: #{bloom_mlp_forward.1} parent=1 // pred_region
      %s82 = ssub.s32 4096, 4096
      %83 = vsyncadd [#allocation12], %s82
      %s84 = sshll.u32 [#allocation11], 4
      %s85 = int_to_ptr.vmem [resolvable:$true] %s84
      %90 = dma.hbm_to_vmem [thread:$0]  %s5, 4096, %s85, [#allocation12], 128, 128, 8
    $region25: #{bloom_mlp_forward.1} parent=1 // pred_fallthru
      _
    // Predicated region
    $region26: #{bloom_mlp_forward.1} parent=1 // pred_check
      _
    $region27: #{bloom_mlp_forward.1} parent=1 // pred_check_branch
      %92 = sbr.rel (0) target = $region29
    $region28: #{bloom_mlp_forward.1} parent=1 // pred_region
      %s94 = ssub.s32 32, 32
      %95 = vsyncadd [#allocation12], %s94
      %s97 = sshll.u32 [#allocation13], 4
      %s98 = int_to_ptr.vmem [resolvable:$true] %s97
      %100 = dma.hbm_to_vmem [thread:$0]  %s6, 32, %s98, [#allocation12]
    $region29: #{bloom_mlp_forward.1} parent=1 // pred_fallthru
      _
    // Predicated region
    $region30: #{bloom_mlp_forward.1} parent=1 // pred_check
      _
    $region31: #{bloom_mlp_forward.1} parent=1 // pred_check_branch
      %102 = sbr.rel (0) target = $region33
    $region32: #{bloom_mlp_forward.1} parent=1 // pred_region
      %s104 = ssub.s32 4096, 4096
      %105 = vsyncadd [#allocation15], %s104
      %s106 = sshll.u32 [#allocation14], 4
      %s107 = int_to_ptr.vmem [resolvable:$true] %s106
      %112 = dma.hbm_to_vmem [thread:$0]  %s7, 4096, %s107, [#allocation15], 128, 128, 8
    $region33: #{bloom_mlp_forward.1} parent=1 // pred_fallthru
      _
    // Predicated region
    $region34: #{bloom_mlp_forward.1} parent=1 // pred_check
      _
    $region35: #{bloom_mlp_forward.1} parent=1 // pred_check_branch
      %114 = sbr.rel (0) target = $region37
    $region36: #{bloom_mlp_forward.1} parent=1 // pred_region
      %s116 = ssub.s32 32, 32
      %117 = vsyncadd [#allocation15], %s116
      %s119 = sshll.u32 [#allocation16], 4
      %s120 = int_to_ptr.vmem [resolvable:$true] %s119
      %122 = dma.hbm_to_vmem [thread:$0]  %s8, 32, %s120, [#allocation15]
    $region37: #{bloom_mlp_forward.1} parent=1 // pred_fallthru
      _
    // Predicated region
    $region38: #{bloom_mlp_forward.1} parent=1 // pred_check
      _
    $region39: #{bloom_mlp_forward.1} parent=1 // pred_check_branch
      %124 = sbr.rel (0) target = $region41
    $region40: #{bloom_mlp_forward.1} parent=1 // pred_region
      %s126 = ssub.s32 4096, 4096
      %127 = vsyncadd [#allocation18], %s126
      %s128 = sshll.u32 [#allocation17], 4
      %s129 = int_to_ptr.vmem [resolvable:$true] %s128
      %134 = dma.hbm_to_vmem [thread:$0]  %s9, 4096, %s129, [#allocation18], 128, 128, 8
    $region41: #{bloom_mlp_forward.1} parent=1 // pred_fallthru
      _
    // Predicated region
    $region42: #{bloom_mlp_forward.1} parent=1 // pred_check
      _
    $region43: #{bloom_mlp_forward.1} parent=1 // pred_check_branch
      %136 = sbr.rel (0) target = $region45
    $region44: #{bloom_mlp_forward.1} parent=1 // pred_region
      %s138 = ssub.s32 32, 32
      %139 = vsyncadd [#allocation18], %s138
      %s141 = sshll.u32 [#allocation19], 4
      %s142 = int_to_ptr.vmem [resolvable:$true] %s141
      %144 = dma.hbm_to_vmem [thread:$0]  %s10, 32, %s142, [#allocation18]
    $region45: #{bloom_mlp_forward.1} parent=1 // pred_fallthru
      _
    // Predicated region
    $region46: #{bloom_mlp_forward.1} parent=1 // pred_check
      _
    $region47: #{bloom_mlp_forward.1} parent=1 // pred_check_branch
      %146 = sbr.rel (0) target = $region49
    $region48: #{bloom_mlp_forward.1} parent=1 // pred_region
      %147 = dma.done [#allocation3], 4096
    $region49: #{bloom_mlp_forward.1} parent=1 // pred_fallthru
      _
    // Predicated region
    $region50: #{bloom_mlp_forward.1} parent=1 // pred_check
      _
    $region51: #{bloom_mlp_forward.1} parent=1 // pred_check_branch
      %149 = sbr.rel (0) target = $region53
    $region52: #{bloom_mlp_forward.1} parent=1 // pred_region
      %150 = dma.done [#allocation6], 8192
    $region53: #{bloom_mlp_forward.1} parent=1 // pred_fallthru
      _
    // Predicated region
    $region54: #{bloom_mlp_forward.1} parent=1 // pred_check
      _
    $region55: #{bloom_mlp_forward.1} parent=1 // pred_check_branch
      %152 = sbr.rel (0) target = $region57
    $region56: #{bloom_mlp_forward.1} parent=1 // pred_region
      %153 = dma.done [#allocation6], 32
    $region57: #{bloom_mlp_forward.1} parent=1 // pred_fallthru
      _
    // Predicated region
    $region58: #{bloom_mlp_forward.1} parent=1 // pred_check
      _
    $region59: #{bloom_mlp_forward.1} parent=1 // pred_check_branch
      %155 = sbr.rel (0) target = $region61
    $region60: #{bloom_mlp_forward.1} parent=1 // pred_region
      %156 = dma.done [#allocation9], 4096
    $region61: #{bloom_mlp_forward.1} parent=1 // pred_fallthru
      _
    // Predicated region
    $region62: #{bloom_mlp_forward.1} parent=1 // pred_check
      _
    $region63: #{bloom_mlp_forward.1} parent=1 // pred_check_branch
      %158 = sbr.rel (0) target = $region65
    $region64: #{bloom_mlp_forward.1} parent=1 // pred_region
      %159 = dma.done [#allocation9], 32
    $region65: #{bloom_mlp_forward.1} parent=1 // pred_fallthru
      _
    // Predicated region
    $region66: #{bloom_mlp_forward.1} parent=1 // pred_check
      _
    $region67: #{bloom_mlp_forward.1} parent=1 // pred_check_branch
      %161 = sbr.rel (0) target = $region69
    $region68: #{bloom_mlp_forward.1} parent=1 // pred_region
      %162 = dma.done [#allocation12], 4096
    $region69: #{bloom_mlp_forward.1} parent=1 // pred_fallthru
      _
    // Predicated region
    $region70: #{bloom_mlp_forward.1} parent=1 // pred_check
      _
    $region71: #{bloom_mlp_forward.1} parent=1 // pred_check_branch
      %164 = sbr.rel (0) target = $region73
    $region72: #{bloom_mlp_forward.1} parent=1 // pred_region
      %165 = dma.done [#allocation12], 32
    $region73: #{bloom_mlp_forward.1} parent=1 // pred_fallthru
      _
    // Predicated region
    $region74: #{bloom_mlp_forward.1} parent=1 // pred_check
      _
    $region75: #{bloom_mlp_forward.1} parent=1 // pred_check_branch
      %167 = sbr.rel (0) target = $region77
    $region76: #{bloom_mlp_forward.1} parent=1 // pred_region
      %168 = dma.done [#allocation15], 4096
    $region77: #{bloom_mlp_forward.1} parent=1 // pred_fallthru
      _
    // Predicated region
    $region78: #{bloom_mlp_forward.1} parent=1 // pred_check
      _
    $region79: #{bloom_mlp_forward.1} parent=1 // pred_check_branch
      %170 = sbr.rel (0) target = $region81
    $region80: #{bloom_mlp_forward.1} parent=1 // pred_region
      %171 = dma.done [#allocation15], 32
    $region81: #{bloom_mlp_forward.1} parent=1 // pred_fallthru
      _
    // Predicated region
    $region82: #{bloom_mlp_forward.1} parent=1 // pred_check
      _
    $region83: #{bloom_mlp_forward.1} parent=1 // pred_check_branch
      %173 = sbr.rel (0) target = $region85
    $region84: #{bloom_mlp_forward.1} parent=1 // pred_region
      %174 = dma.done [#allocation18], 4096
    $region85: #{bloom_mlp_forward.1} parent=1 // pred_fallthru
      _
    // Predicated region
    $region86: #{bloom_mlp_forward.1} parent=1 // pred_check
      _
    $region87: #{bloom_mlp_forward.1} parent=1 // pred_check_branch
      %176 = sbr.rel (0) target = $region89
    $region88: #{bloom_mlp_forward.1} parent=1 // pred_region
      %177 = dma.done [#allocation18], 32
    $region89: #{bloom_mlp_forward.1} parent=1 // pred_fallthru
      _
    %v178 = vld [vmem:[#allocation2] sm:$0xff]
    %v179 = vld [vmem:[#allocation2 + $0x8] sm:$0xff]
    %v180 = vld [vmem:[#allocation2 + $0x10] sm:$0xff]
    %v181 = vld [vmem:[#allocation2 + $0x18] sm:$0xff]
    %v182 = vld [vmem:[#allocation2 + $0x20] sm:$0xff]
    %v183 = vld [vmem:[#allocation2 + $0x28] sm:$0xff]
    %v184 = vld [vmem:[#allocation2 + $0x30] sm:$0xff]
    %v185 = vld [vmem:[#allocation2 + $0x38] sm:$0xff]
    %v186 = vld [vmem:[#allocation2 + $0x40] sm:$0xff]
    %v187 = vld [vmem:[#allocation2 + $0x48] sm:$0xff]
    %v188 = vld [vmem:[#allocation2 + $0x50] sm:$0xff]
    %v189 = vld [vmem:[#allocation2 + $0x58] sm:$0xff]
    %v190 = vld [vmem:[#allocation2 + $0x60] sm:$0xff]
    %v191 = vld [vmem:[#allocation2 + $0x68] sm:$0xff]
    %v192 = vld [vmem:[#allocation2 + $0x70] sm:$0xff]
    %v193 = vld [vmem:[#allocation2 + $0x78] sm:$0xff]
    %v194 = vld [vmem:[#allocation2 + $0x80] sm:$0xff]
    %v195 = vld [vmem:[#allocation2 + $0x88] sm:$0xff]
    %v196 = vld [vmem:[#allocation2 + $0x90] sm:$0xff]
    %v197 = vld [vmem:[#allocation2 + $0x98] sm:$0xff]
    %v198 = vld [vmem:[#allocation2 + $0xa0] sm:$0xff]
    %v199 = vld [vmem:[#allocation2 + $0xa8] sm:$0xff]
    %v200 = vld [vmem:[#allocation2 + $0xb0] sm:$0xff]
    %v201 = vld [vmem:[#allocation2 + $0xb8] sm:$0xff]
    %v202 = vld [vmem:[#allocation2 + $0xc0] sm:$0xff]
    %v203 = vld [vmem:[#allocation2 + $0xc8] sm:$0xff]
    %v204 = vld [vmem:[#allocation2 + $0xd0] sm:$0xff]
    %v205 = vld [vmem:[#allocation2 + $0xd8] sm:$0xff]
    %v206 = vld [vmem:[#allocation2 + $0xe0] sm:$0xff]
    %v207 = vld [vmem:[#allocation2 + $0xe8] sm:$0xff]
    %v208 = vld [vmem:[#allocation2 + $0xf0] sm:$0xff]
    %v209 = vld [vmem:[#allocation2 + $0xf8] sm:$0xff]
    %v210 = vld [vmem:[#allocation5] sm:$0xff]
    %v211 = vld [vmem:[#allocation5 + $0x8] sm:$0xff]
    %v212 = vld [vmem:[#allocation5 + $0x10] sm:$0xff]
    %v213 = vld [vmem:[#allocation5 + $0x18] sm:$0xff]
    %v214 = vld [vmem:[#allocation5 + $0x20] sm:$0xff]
    %v215 = vld [vmem:[#allocation5 + $0x28] sm:$0xff]
    %v216 = vld [vmem:[#allocation5 + $0x30] sm:$0xff]
    %v217 = vld [vmem:[#allocation5 + $0x38] sm:$0xff]
    %v218 = vld [vmem:[#allocation5 + $0x40] sm:$0xff]
    %v219 = vld [vmem:[#allocation5 + $0x48] sm:$0xff]
    %v220 = vld [vmem:[#allocation5 + $0x50] sm:$0xff]
    %v221 = vld [vmem:[#allocation5 + $0x58] sm:$0xff]
    %v222 = vld [vmem:[#allocation5 + $0x60] sm:$0xff]
    %v223 = vld [vmem:[#allocation5 + $0x68] sm:$0xff]
    %v224 = vld [vmem:[#allocation5 + $0x70] sm:$0xff]
    %v225 = vld [vmem:[#allocation5 + $0x78] sm:$0xff]
    %v226 = vld [vmem:[#allocation5 + $0x80] sm:$0xff]
    %v227 = vld [vmem:[#allocation5 + $0x88] sm:$0xff]
    %v228 = vld [vmem:[#allocation5 + $0x90] sm:$0xff]
    %v229 = vld [vmem:[#allocation5 + $0x98] sm:$0xff]
    %v230 = vld [vmem:[#allocation5 + $0xa0] sm:$0xff]
    %v231 = vld [vmem:[#allocation5 + $0xa8] sm:$0xff]
    %v232 = vld [vmem:[#allocation5 + $0xb0] sm:$0xff]
    %v233 = vld [vmem:[#allocation5 + $0xb8] sm:$0xff]
    %v234 = vld [vmem:[#allocation5 + $0xc0] sm:$0xff]
    %v235 = vld [vmem:[#allocation5 + $0xc8] sm:$0xff]
    %v236 = vld [vmem:[#allocation5 + $0xd0] sm:$0xff]
    %v237 = vld [vmem:[#allocation5 + $0xd8] sm:$0xff]
    %v238 = vld [vmem:[#allocation5 + $0xe0] sm:$0xff]
    %v239 = vld [vmem:[#allocation5 + $0xe8] sm:$0xff]
    %v240 = vld [vmem:[#allocation5 + $0xf0] sm:$0xff]
    %v241 = vld [vmem:[#allocation5 + $0xf8] sm:$0xff]
    %v242 = vld [vmem:[#allocation5 + $0x100] sm:$0xff]
    %v243 = vld [vmem:[#allocation5 + $0x108] sm:$0xff]
    %v244 = vld [vmem:[#allocation5 + $0x110] sm:$0xff]
    %v245 = vld [vmem:[#allocation5 + $0x118] sm:$0xff]
    %v246 = vld [vmem:[#allocation5 + $0x120] sm:$0xff]
    %v247 = vld [vmem:[#allocation5 + $0x128] sm:$0xff]
    %v248 = vld [vmem:[#allocation5 + $0x130] sm:$0xff]
    %v249 = vld [vmem:[#allocation5 + $0x138] sm:$0xff]
    %v250 = vld [vmem:[#allocation5 + $0x140] sm:$0xff]
    %v251 = vld [vmem:[#allocation5 + $0x148] sm:$0xff]
    %v252 = vld [vmem:[#allocation5 + $0x150] sm:$0xff]
    %v253 = vld [vmem:[#allocation5 + $0x158] sm:$0xff]
    %v254 = vld [vmem:[#allocation5 + $0x160] sm:$0xff]
    %v255 = vld [vmem:[#allocation5 + $0x168] sm:$0xff]
    %v256 = vld [vmem:[#allocation5 + $0x170] sm:$0xff]
    %v257 = vld [vmem:[#allocation5 + $0x178] sm:$0xff]
    %v258 = vld [vmem:[#allocation5 + $0x180] sm:$0xff]
    %v259 = vld [vmem:[#allocation5 + $0x188] sm:$0xff]
    %v260 = vld [vmem:[#allocation5 + $0x190] sm:$0xff]
    %v261 = vld [vmem:[#allocation5 + $0x198] sm:$0xff]
    %v262 = vld [vmem:[#allocation5 + $0x1a0] sm:$0xff]
    %v263 = vld [vmem:[#allocation5 + $0x1a8] sm:$0xff]
    %v264 = vld [vmem:[#allocation5 + $0x1b0] sm:$0xff]
    %v265 = vld [vmem:[#allocation5 + $0x1b8] sm:$0xff]
    %v266 = vld [vmem:[#allocation5 + $0x1c0] sm:$0xff]
    %v267 = vld [vmem:[#allocation5 + $0x1c8] sm:$0xff]
    %v268 = vld [vmem:[#allocation5 + $0x1d0] sm:$0xff]
    %v269 = vld [vmem:[#allocation5 + $0x1d8] sm:$0xff]
    %v270 = vld [vmem:[#allocation5 + $0x1e0] sm:$0xff]
    %v271 = vld [vmem:[#allocation5 + $0x1e8] sm:$0xff]
    %v272 = vld [vmem:[#allocation5 + $0x1f0] sm:$0xff]
    %v273 = vld [vmem:[#allocation5 + $0x1f8] sm:$0xff]
    %v274 = vld [vmem:[#allocation7] sm:$0x3]
    %v276 = vlaneseq
    %v277 = vshrl.u32 %v276, 7
    %v278 = vsub.s32 0, %v277
    %v279 = vrot.slane %v274, %v278
    %v280 = vlaneseq
    %v281 = vshrl.u32 %v280, 7
    %v282 = vsub.s32 1, %v281
    %v283 = vrot.slane %v274, %v282
    %v318 = vunpack.c.l.b16 %v178
    %v319 = vunpack.c.h.b16 %v178
    %v320 = vunpack.c.l.b16 %v179
    %v321 = vunpack.c.h.b16 %v179
    %v322 = vunpack.c.l.b16 %v180
    %v323 = vunpack.c.h.b16 %v180
    %v324 = vunpack.c.l.b16 %v181
    %v325 = vunpack.c.h.b16 %v181
    %v326 = vunpack.c.l.b16 %v182
    %v327 = vunpack.c.h.b16 %v182
    %v328 = vunpack.c.l.b16 %v183
    %v329 = vunpack.c.h.b16 %v183
    %v330 = vunpack.c.l.b16 %v184
    %v331 = vunpack.c.h.b16 %v184
    %v332 = vunpack.c.l.b16 %v185
    %v333 = vunpack.c.h.b16 %v185
    %v334 = vunpack.c.l.b16 %v186
    %v335 = vunpack.c.h.b16 %v186
    %v336 = vunpack.c.l.b16 %v187
    %v337 = vunpack.c.h.b16 %v187
    %v338 = vunpack.c.l.b16 %v188
    %v339 = vunpack.c.h.b16 %v188
    %v340 = vunpack.c.l.b16 %v189
    %v341 = vunpack.c.h.b16 %v189
    %v342 = vunpack.c.l.b16 %v190
    %v343 = vunpack.c.h.b16 %v190
    %v344 = vunpack.c.l.b16 %v191
    %v345 = vunpack.c.h.b16 %v191
    %v346 = vunpack.c.l.b16 %v192
    %v347 = vunpack.c.h.b16 %v192
    %v348 = vunpack.c.l.b16 %v193
    %v349 = vunpack.c.h.b16 %v193
    %v350 = vunpack.c.l.b16 %v194
    %v351 = vunpack.c.h.b16 %v194
    %v352 = vunpack.c.l.b16 %v195
    %v353 = vunpack.c.h.b16 %v195
    %v354 = vunpack.c.l.b16 %v196
    %v355 = vunpack.c.h.b16 %v196
    %v356 = vunpack.c.l.b16 %v197
    %v357 = vunpack.c.h.b16 %v197
    %v358 = vunpack.c.l.b16 %v198
    %v359 = vunpack.c.h.b16 %v198
    %v360 = vunpack.c.l.b16 %v199
    %v361 = vunpack.c.h.b16 %v199
    %v362 = vunpack.c.l.b16 %v200
    %v363 = vunpack.c.h.b16 %v200
    %v364 = vunpack.c.l.b16 %v201
    %v365 = vunpack.c.h.b16 %v201
    %v366 = vunpack.c.l.b16 %v202
    %v367 = vunpack.c.h.b16 %v202
    %v368 = vunpack.c.l.b16 %v203
    %v369 = vunpack.c.h.b16 %v203
    %v370 = vunpack.c.l.b16 %v204
    %v371 = vunpack.c.h.b16 %v204
    %v372 = vunpack.c.l.b16 %v205
    %v373 = vunpack.c.h.b16 %v205
    %v374 = vunpack.c.l.b16 %v206
    %v375 = vunpack.c.h.b16 %v206
    %v376 = vunpack.c.l.b16 %v207
    %v377 = vunpack.c.h.b16 %v207
    %v378 = vunpack.c.l.b16 %v208
    %v379 = vunpack.c.h.b16 %v208
    %v380 = vunpack.c.l.b16 %v209
    %v381 = vunpack.c.h.b16 %v209
    %v382 = vpack.c.b16 %v322, %v318
    %v383 = vpack.c.b16 %v323, %v319
    %v384 = vpack.c.b16 %v324, %v320
    %v385 = vpack.c.b16 %v325, %v321
    %v386 = vpack.c.b16 %v330, %v326
    %v387 = vpack.c.b16 %v331, %v327
    %v388 = vpack.c.b16 %v332, %v328
    %v389 = vpack.c.b16 %v333, %v329
    %v390 = vpack.c.b16 %v338, %v334
    %v391 = vpack.c.b16 %v339, %v335
    %v392 = vpack.c.b16 %v340, %v336
    %v393 = vpack.c.b16 %v341, %v337
    %v394 = vpack.c.b16 %v346, %v342
    %v395 = vpack.c.b16 %v347, %v343
    %v396 = vpack.c.b16 %v348, %v344
    %v397 = vpack.c.b16 %v349, %v345
    %v398 = vpack.c.b16 %v354, %v350
    %v399 = vpack.c.b16 %v355, %v351
    %v400 = vpack.c.b16 %v356, %v352
    %v401 = vpack.c.b16 %v357, %v353
    %v402 = vpack.c.b16 %v362, %v358
    %v403 = vpack.c.b16 %v363, %v359
    %v404 = vpack.c.b16 %v364, %v360
    %v405 = vpack.c.b16 %v365, %v361
    %v406 = vpack.c.b16 %v370, %v366
    %v407 = vpack.c.b16 %v371, %v367
    %v408 = vpack.c.b16 %v372, %v368
    %v409 = vpack.c.b16 %v373, %v369
    %v410 = vpack.c.b16 %v378, %v374
    %v411 = vpack.c.b16 %v379, %v375
    %v412 = vpack.c.b16 %v380, %v376
    %v413 = vpack.c.b16 %v381, %v377
    %v510 = vunpack.c.l.b16 %v210
    %v511 = vunpack.c.h.b16 %v210
    %v512 = vunpack.c.l.b16 %v211
    %v513 = vunpack.c.h.b16 %v211
    %v514 = vunpack.c.l.b16 %v212
    %v515 = vunpack.c.h.b16 %v212
    %v516 = vunpack.c.l.b16 %v213
    %v517 = vunpack.c.h.b16 %v213
    %v518 = vunpack.c.l.b16 %v214
    %v519 = vunpack.c.h.b16 %v214
    %v520 = vunpack.c.l.b16 %v215
    %v521 = vunpack.c.h.b16 %v215
    %v522 = vunpack.c.l.b16 %v216
    %v523 = vunpack.c.h.b16 %v216
    %v524 = vunpack.c.l.b16 %v217
    %v525 = vunpack.c.h.b16 %v217
    %v526 = vunpack.c.l.b16 %v218
    %v527 = vunpack.c.h.b16 %v218
    %v528 = vunpack.c.l.b16 %v219
    %v529 = vunpack.c.h.b16 %v219
    %v530 = vunpack.c.l.b16 %v220
    %v531 = vunpack.c.h.b16 %v220
    %v532 = vunpack.c.l.b16 %v221
    %v533 = vunpack.c.h.b16 %v221
    %v534 = vunpack.c.l.b16 %v222
    %v535 = vunpack.c.h.b16 %v222
    %v536 = vunpack.c.l.b16 %v223
    %v537 = vunpack.c.h.b16 %v223
    %v538 = vunpack.c.l.b16 %v224
    %v539 = vunpack.c.h.b16 %v224
    %v540 = vunpack.c.l.b16 %v225
    %v541 = vunpack.c.h.b16 %v225
    %v542 = vunpack.c.l.b16 %v226
    %v543 = vunpack.c.h.b16 %v226
    %v544 = vunpack.c.l.b16 %v227
    %v545 = vunpack.c.h.b16 %v227
    %v546 = vunpack.c.l.b16 %v228
    %v547 = vunpack.c.h.b16 %v228
    %v548 = vunpack.c.l.b16 %v229
    %v549 = vunpack.c.h.b16 %v229
    %v550 = vunpack.c.l.b16 %v230
    %v551 = vunpack.c.h.b16 %v230
    %v552 = vunpack.c.l.b16 %v231
    %v553 = vunpack.c.h.b16 %v231
    %v554 = vunpack.c.l.b16 %v232
    %v555 = vunpack.c.h.b16 %v232
    %v556 = vunpack.c.l.b16 %v233
    %v557 = vunpack.c.h.b16 %v233
    %v558 = vunpack.c.l.b16 %v234
    %v559 = vunpack.c.h.b16 %v234
    %v560 = vunpack.c.l.b16 %v235
    %v561 = vunpack.c.h.b16 %v235
    %v562 = vunpack.c.l.b16 %v236
    %v563 = vunpack.c.h.b16 %v236
    %v564 = vunpack.c.l.b16 %v237
    %v565 = vunpack.c.h.b16 %v237
    %v566 = vunpack.c.l.b16 %v238
    %v567 = vunpack.c.h.b16 %v238
    %v568 = vunpack.c.l.b16 %v239
    %v569 = vunpack.c.h.b16 %v239
    %v570 = vunpack.c.l.b16 %v240
    %v571 = vunpack.c.h.b16 %v240
    %v572 = vunpack.c.l.b16 %v241
    %v573 = vunpack.c.h.b16 %v241
    %v574 = vunpack.c.l.b16 %v242
    %v575 = vunpack.c.h.b16 %v242
    %v576 = vunpack.c.l.b16 %v243
    %v577 = vunpack.c.h.b16 %v243
    %v578 = vunpack.c.l.b16 %v244
    %v579 = vunpack.c.h.b16 %v244
    %v580 = vunpack.c.l.b16 %v245
    %v581 = vunpack.c.h.b16 %v245
    %v582 = vunpack.c.l.b16 %v246
    %v583 = vunpack.c.h.b16 %v246
    %v584 = vunpack.c.l.b16 %v247
    %v585 = vunpack.c.h.b16 %v247
    %v586 = vunpack.c.l.b16 %v248
    %v587 = vunpack.c.h.b16 %v248
    %v588 = vunpack.c.l.b16 %v249
    %v589 = vunpack.c.h.b16 %v249
    %v590 = vunpack.c.l.b16 %v250
    %v591 = vunpack.c.h.b16 %v250
    %v592 = vunpack.c.l.b16 %v251
    %v593 = vunpack.c.h.b16 %v251
    %v594 = vunpack.c.l.b16 %v252
    %v595 = vunpack.c.h.b16 %v252
    %v596 = vunpack.c.l.b16 %v253
    %v597 = vunpack.c.h.b16 %v253
    %v598 = vunpack.c.l.b16 %v254
    %v599 = vunpack.c.h.b16 %v254
    %v600 = vunpack.c.l.b16 %v255
    %v601 = vunpack.c.h.b16 %v255
    %v602 = vunpack.c.l.b16 %v256
    %v603 = vunpack.c.h.b16 %v256
    %v604 = vunpack.c.l.b16 %v257
    %v605 = vunpack.c.h.b16 %v257
    %v606 = vunpack.c.l.b16 %v258
    %v607 = vunpack.c.h.b16 %v258
    %v608 = vunpack.c.l.b16 %v259
    %v609 = vunpack.c.h.b16 %v259
    %v610 = vunpack.c.l.b16 %v260
    %v611 = vunpack.c.h.b16 %v260
    %v612 = vunpack.c.l.b16 %v261
    %v613 = vunpack.c.h.b16 %v261
    %v614 = vunpack.c.l.b16 %v262
    %v615 = vunpack.c.h.b16 %v262
    %v616 = vunpack.c.l.b16 %v263
    %v617 = vunpack.c.h.b16 %v263
    %v618 = vunpack.c.l.b16 %v264
    %v619 = vunpack.c.h.b16 %v264
    %v620 = vunpack.c.l.b16 %v265
    %v621 = vunpack.c.h.b16 %v265
    %v622 = vunpack.c.l.b16 %v266
    %v623 = vunpack.c.h.b16 %v266
    %v624 = vunpack.c.l.b16 %v267
    %v625 = vunpack.c.h.b16 %v267
    %v626 = vunpack.c.l.b16 %v268
    %v627 = vunpack.c.h.b16 %v268
    %v628 = vunpack.c.l.b16 %v269
    %v629 = vunpack.c.h.b16 %v269
    %v630 = vunpack.c.l.b16 %v270
    %v631 = vunpack.c.h.b16 %v270
    %v632 = vunpack.c.l.b16 %v271
    %v633 = vunpack.c.h.b16 %v271
    %v634 = vunpack.c.l.b16 %v272
    %v635 = vunpack.c.h.b16 %v272
    %v636 = vunpack.c.l.b16 %v273
    %v637 = vunpack.c.h.b16 %v273
    %v638 = vpack.c.b16 %v512, %v510
    %v639 = vpack.c.b16 %v513, %v511
    %v640 = vpack.c.b16 %v516, %v514
    %v641 = vpack.c.b16 %v517, %v515
    %v642 = vpack.c.b16 %v520, %v518
    %v643 = vpack.c.b16 %v521, %v519
    %v644 = vpack.c.b16 %v524, %v522
    %v645 = vpack.c.b16 %v525, %v523
    %v646 = vpack.c.b16 %v528, %v526
    %v647 = vpack.c.b16 %v529, %v527
    %v648 = vpack.c.b16 %v532, %v530
    %v649 = vpack.c.b16 %v533, %v531
    %v650 = vpack.c.b16 %v536, %v534
    %v651 = vpack.c.b16 %v537, %v535
    %v652 = vpack.c.b16 %v540, %v538
    %v653 = vpack.c.b16 %v541, %v539
    %v654 = vpack.c.b16 %v544, %v542
    %v655 = vpack.c.b16 %v545, %v543
    %v656 = vpack.c.b16 %v548, %v546
    %v657 = vpack.c.b16 %v549, %v547
    %v658 = vpack.c.b16 %v552, %v550
    %v659 = vpack.c.b16 %v553, %v551
    %v660 = vpack.c.b16 %v556, %v554
    %v661 = vpack.c.b16 %v557, %v555
    %v662 = vpack.c.b16 %v560, %v558
    %v663 = vpack.c.b16 %v561, %v559
    %v664 = vpack.c.b16 %v564, %v562
    %v665 = vpack.c.b16 %v565, %v563
    %v666 = vpack.c.b16 %v568, %v566
    %v667 = vpack.c.b16 %v569, %v567
    %v668 = vpack.c.b16 %v572, %v570
    %v669 = vpack.c.b16 %v573, %v571
    %v670 = vpack.c.b16 %v576, %v574
    %v671 = vpack.c.b16 %v577, %v575
    %v672 = vpack.c.b16 %v580, %v578
    %v673 = vpack.c.b16 %v581, %v579
    %v674 = vpack.c.b16 %v584, %v582
    %v675 = vpack.c.b16 %v585, %v583
    %v676 = vpack.c.b16 %v588, %v586
    %v677 = vpack.c.b16 %v589, %v587
    %v678 = vpack.c.b16 %v592, %v590
    %v679 = vpack.c.b16 %v593, %v591
    %v680 = vpack.c.b16 %v596, %v594
    %v681 = vpack.c.b16 %v597, %v595
    %v682 = vpack.c.b16 %v600, %v598
    %v683 = vpack.c.b16 %v601, %v599
    %v684 = vpack.c.b16 %v604, %v602
    %v685 = vpack.c.b16 %v605, %v603
    %v686 = vpack.c.b16 %v608, %v606
    %v687 = vpack.c.b16 %v609, %v607
    %v688 = vpack.c.b16 %v612, %v610
    %v689 = vpack.c.b16 %v613, %v611
    %v690 = vpack.c.b16 %v616, %v614
    %v691 = vpack.c.b16 %v617, %v615
    %v692 = vpack.c.b16 %v620, %v618
    %v693 = vpack.c.b16 %v621, %v619
    %v694 = vpack.c.b16 %v624, %v622
    %v695 = vpack.c.b16 %v625, %v623
    %v696 = vpack.c.b16 %v628, %v626
    %v697 = vpack.c.b16 %v629, %v627
    %v698 = vpack.c.b16 %v632, %v630
    %v699 = vpack.c.b16 %v633, %v631
    %v700 = vpack.c.b16 %v636, %v634
    %v701 = vpack.c.b16 %v637, %v635
    %766 = vmatprep.subr.bf16.mxu0 %v639
    %767 = vmatpush1.bf16.msra.mxu0 %v638
    %768 = vmatprep.subr.bf16.mxu0 %v641
    %769 = vmatpush1.bf16.msra.mxu0 %v640
    %770 = vmatprep.subr.bf16.mxu0 %v643
    %771 = vmatpush1.bf16.msra.mxu0 %v642
    %772 = vmatprep.subr.bf16.mxu0 %v645
    %773 = vmatpush1.bf16.msra.mxu0 %v644
    %774 = vmatprep.subr.bf16.mxu0 %v647
    %775 = vmatpush1.bf16.msra.mxu0 %v646
    %776 = vmatprep.subr.bf16.mxu0 %v649
    %777 = vmatpush1.bf16.msra.mxu0 %v648
    %778 = vmatprep.subr.bf16.mxu0 %v651
    %779 = vmatpush1.bf16.msra.mxu0 %v650
    %780 = vmatprep.subr.bf16.mxu0 %v653
    %781 = vmatpush1.bf16.msra.mxu0 %v652
    %782 = vmatprep.subr.bf16.mxu0 %v655
    %783 = vmatpush1.bf16.msra.mxu0 %v654
    %784 = vmatprep.subr.bf16.mxu0 %v657
    %785 = vmatpush1.bf16.msra.mxu0 %v656
    %786 = vmatprep.subr.bf16.mxu0 %v659
    %787 = vmatpush1.bf16.msra.mxu0 %v658
    %788 = vmatprep.subr.bf16.mxu0 %v661
    %789 = vmatpush1.bf16.msra.mxu0 %v660
    %790 = vmatprep.subr.bf16.mxu0 %v663
    %791 = vmatpush1.bf16.msra.mxu0 %v662
    %792 = vmatprep.subr.bf16.mxu0 %v665
    %793 = vmatpush1.bf16.msra.mxu0 %v664
    %794 = vmatprep.subr.bf16.mxu0 %v667
    %795 = vmatpush1.bf16.msra.mxu0 %v666
    %796 = vmatprep.subr.bf16.mxu0 %v669
    %797 = vmatpush1.bf16.msra.mxu0 %v668
    %798 = vmatprep.mubr.bf16.mxu0 %v383
    %799 = vmatmul.mubr.bf16.gmra.mrb[0].mxu0 %v382
    %v800 = vpop.f32.mrb[0].mxu0
    %v801 = vadd.f32 %v279, %v800
    %v802 = vpop.f32.mrb[0].mxu0
    %v803 = vadd.f32 %v283, %v802
    %v804 = vpop.f32.mrb[0].mxu0
    %v805 = vadd.f32 %v279, %v804
    %v806 = vpop.f32.mrb[0].mxu0
    %v807 = vadd.f32 %v283, %v806
    %808 = vmatprep.mubr.bf16.mxu0 %v387
    %809 = vmatmul.mubr.bf16.gmra.mrb[0].mxu0 %v386
    %v810 = vpop.f32.mrb[0].mxu0
    %v811 = vadd.f32 %v279, %v810
    %v812 = vpop.f32.mrb[0].mxu0
    %v813 = vadd.f32 %v283, %v812
    %v814 = vpop.f32.mrb[0].mxu0
    %v815 = vadd.f32 %v279, %v814
    %v816 = vpop.f32.mrb[0].mxu0
    %v817 = vadd.f32 %v283, %v816
    %818 = vmatprep.mubr.bf16.mxu0 %v391
    %819 = vmatmul.mubr.bf16.gmra.mrb[0].mxu0 %v390
    %v820 = vpop.f32.mrb[0].mxu0
    %v821 = vadd.f32 %v279, %v820
    %v822 = vpop.f32.mrb[0].mxu0
    %v823 = vadd.f32 %v283, %v822
    %v824 = vpop.f32.mrb[0].mxu0
    %v825 = vadd.f32 %v279, %v824
    %v826 = vpop.f32.mrb[0].mxu0
    %v827 = vadd.f32 %v283, %v826
    %828 = vmatprep.mubr.bf16.mxu0 %v395
    %829 = vmatmul.mubr.bf16.gmra.mrb[0].mxu0 %v394
    %v830 = vpop.f32.mrb[0].mxu0
    %v831 = vadd.f32 %v279, %v830
    %v832 = vpop.f32.mrb[0].mxu0
    %v833 = vadd.f32 %v283, %v832
    %v834 = vpop.f32.mrb[0].mxu0
    %v835 = vadd.f32 %v279, %v834
    %v836 = vpop.f32.mrb[0].mxu0
    %v837 = vadd.f32 %v283, %v836
    %838 = vmatprep.mubr.bf16.mxu0 %v399
    %839 = vmatmul.mubr.bf16.gmra.mrb[0].mxu0 %v398
    %v840 = vpop.f32.mrb[0].mxu0
    %v841 = vadd.f32 %v279, %v840
    %v842 = vpop.f32.mrb[0].mxu0
    %v843 = vadd.f32 %v283, %v842
    %v844 = vpop.f32.mrb[0].mxu0
    %v845 = vadd.f32 %v279, %v844
    %v846 = vpop.f32.mrb[0].mxu0
    %v847 = vadd.f32 %v283, %v846
    %848 = vmatprep.mubr.bf16.mxu0 %v403
    %849 = vmatmul.mubr.bf16.gmra.mrb[0].mxu0 %v402
    %v850 = vpop.f32.mrb[0].mxu0
    %v851 = vadd.f32 %v279, %v850
    %v852 = vpop.f32.mrb[0].mxu0
    %v853 = vadd.f32 %v283, %v852
    %v854 = vpop.f32.mrb[0].mxu0
    %v855 = vadd.f32 %v279, %v854
    %v856 = vpop.f32.mrb[0].mxu0
    %v857 = vadd.f32 %v283, %v856
    %858 = vmatprep.mubr.bf16.mxu0 %v407
    %859 = vmatmul.mubr.bf16.gmra.mrb[0].mxu0 %v406
    %v860 = vpop.f32.mrb[0].mxu0
    %v861 = vadd.f32 %v279, %v860
    %v862 = vpop.f32.mrb[0].mxu0
    %v863 = vadd.f32 %v283, %v862
    %v864 = vpop.f32.mrb[0].mxu0
    %v865 = vadd.f32 %v279, %v864
    %v866 = vpop.f32.mrb[0].mxu0
    %v867 = vadd.f32 %v283, %v866
    %868 = vmatprep.mubr.bf16.mxu0 %v411
    %869 = vmatmul.mubr.bf16.gmra.mrb[0].mxu0 %v410
    %v870 = vpop.f32.mrb[0].mxu0
    %v871 = vadd.f32 %v279, %v870
    %v872 = vpop.f32.mrb[0].mxu0
    %v873 = vadd.f32 %v283, %v872
    %v874 = vpop.f32.mrb[0].mxu0
    %v875 = vadd.f32 %v279, %v874
    %v876 = vpop.f32.mrb[0].mxu0
    %v877 = vadd.f32 %v283, %v876
    %878 = vdwg.mxu0
    %879 = vmatprep.subr.bf16.mxu0 %v671
    %880 = vmatpush1.bf16.msra.mxu0 %v670
    %881 = vmatprep.subr.bf16.mxu0 %v673
    %882 = vmatpush1.bf16.msra.mxu0 %v672
    %883 = vmatprep.subr.bf16.mxu0 %v675
    %884 = vmatpush1.bf16.msra.mxu0 %v674
    %885 = vmatprep.subr.bf16.mxu0 %v677
    %886 = vmatpush1.bf16.msra.mxu0 %v676
    %887 = vmatprep.subr.bf16.mxu0 %v679
    %888 = vmatpush1.bf16.msra.mxu0 %v678
    %889 = vmatprep.subr.bf16.mxu0 %v681
    %890 = vmatpush1.bf16.msra.mxu0 %v680
    %891 = vmatprep.subr.bf16.mxu0 %v683
    %892 = vmatpush1.bf16.msra.mxu0 %v682
    %893 = vmatprep.subr.bf16.mxu0 %v685
    %894 = vmatpush1.bf16.msra.mxu0 %v684
    %895 = vmatprep.subr.bf16.mxu0 %v687
    %896 = vmatpush1.bf16.msra.mxu0 %v686
    %897 = vmatprep.subr.bf16.mxu0 %v689
    %898 = vmatpush1.bf16.msra.mxu0 %v688
    %899 = vmatprep.subr.bf16.mxu0 %v691
    %900 = vmatpush1.bf16.msra.mxu0 %v690
    %901 = vmatprep.subr.bf16.mxu0 %v693
    %902 = vmatpush1.bf16.msra.mxu0 %v692
    %903 = vmatprep.subr.bf16.mxu0 %v695
    %904 = vmatpush1.bf16.msra.mxu0 %v694
    %905 = vmatprep.subr.bf16.mxu0 %v697
    %906 = vmatpush1.bf16.msra.mxu0 %v696
    %907 = vmatprep.subr.bf16.mxu0 %v699
    %908 = vmatpush1.bf16.msra.mxu0 %v698
    %909 = vmatprep.subr.bf16.mxu0 %v701
    %910 = vmatpush1.bf16.msra.mxu0 %v700
    %911 = vmatprep.mubr.bf16.mxu0 %v385
    %912 = vmatmul.mubr.bf16.gmra.mrb[0].mxu0 %v384
    %v913 = vpop.f32.mrb[0].mxu0
    %v914 = vadd.f32 %v801, %v913
    %v915 = vpop.f32.mrb[0].mxu0
    %v916 = vadd.f32 %v803, %v915
    %v917 = vpop.f32.mrb[0].mxu0
    %v918 = vadd.f32 %v805, %v917
    %v919 = vpop.f32.mrb[0].mxu0
    %v920 = vadd.f32 %v807, %v919
    %921 = vmatprep.mubr.bf16.mxu0 %v389
    %922 = vmatmul.mubr.bf16.gmra.mrb[0].mxu0 %v388
    %v923 = vpop.f32.mrb[0].mxu0
    %v924 = vadd.f32 %v811, %v923
    %v925 = vpop.f32.mrb[0].mxu0
    %v926 = vadd.f32 %v813, %v925
    %v927 = vpop.f32.mrb[0].mxu0
    %v928 = vadd.f32 %v815, %v927
    %v929 = vpop.f32.mrb[0].mxu0
    %v930 = vadd.f32 %v817, %v929
    %931 = vmatprep.mubr.bf16.mxu0 %v393
    %932 = vmatmul.mubr.bf16.gmra.mrb[0].mxu0 %v392
    %v933 = vpop.f32.mrb[0].mxu0
    %v934 = vadd.f32 %v821, %v933
    %v935 = vpop.f32.mrb[0].mxu0
    %v936 = vadd.f32 %v823, %v935
    %v937 = vpop.f32.mrb[0].mxu0
    %v938 = vadd.f32 %v825, %v937
    %v939 = vpop.f32.mrb[0].mxu0
    %v940 = vadd.f32 %v827, %v939
    %941 = vmatprep.mubr.bf16.mxu0 %v397
    %942 = vmatmul.mubr.bf16.gmra.mrb[0].mxu0 %v396
    %v943 = vpop.f32.mrb[0].mxu0
    %v944 = vadd.f32 %v831, %v943
    %v945 = vpop.f32.mrb[0].mxu0
    %v946 = vadd.f32 %v833, %v945
    %v947 = vpop.f32.mrb[0].mxu0
    %v948 = vadd.f32 %v835, %v947
    %v949 = vpop.f32.mrb[0].mxu0
    %v950 = vadd.f32 %v837, %v949
    %951 = vmatprep.mubr.bf16.mxu0 %v401
    %952 = vmatmul.mubr.bf16.gmra.mrb[0].mxu0 %v400
    %v953 = vpop.f32.mrb[0].mxu0
    %v954 = vadd.f32 %v841, %v953
    %v955 = vpop.f32.mrb[0].mxu0
    %v956 = vadd.f32 %v843, %v955
    %v957 = vpop.f32.mrb[0].mxu0
    %v958 = vadd.f32 %v845, %v957
    %v959 = vpop.f32.mrb[0].mxu0
    %v960 = vadd.f32 %v847, %v959
    %961 = vmatprep.mubr.bf16.mxu0 %v405
    %962 = vmatmul.mubr.bf16.gmra.mrb[0].mxu0 %v404
    %v963 = vpop.f32.mrb[0].mxu0
    %v964 = vadd.f32 %v851, %v963
    %v965 = vpop.f32.mrb[0].mxu0
    %v966 = vadd.f32 %v853, %v965
    %v967 = vpop.f32.mrb[0].mxu0
    %v968 = vadd.f32 %v855, %v967
    %v969 = vpop.f32.mrb[0].mxu0
    %v970 = vadd.f32 %v857, %v969
    %971 = vmatprep.mubr.bf16.mxu0 %v409
    %972 = vmatmul.mubr.bf16.gmra.mrb[0].mxu0 %v408
    %v973 = vpop.f32.mrb[0].mxu0
    %v974 = vadd.f32 %v861, %v973
    %v975 = vpop.f32.mrb[0].mxu0
    %v976 = vadd.f32 %v863, %v975
    %v977 = vpop.f32.mrb[0].mxu0
    %v978 = vadd.f32 %v865, %v977
    %v979 = vpop.f32.mrb[0].mxu0
    %v980 = vadd.f32 %v867, %v979
    %981 = vmatprep.mubr.bf16.mxu0 %v413
    %982 = vmatmul.mubr.bf16.gmra.mrb[0].mxu0 %v412
    %v983 = vpop.f32.mrb[0].mxu0
    %v984 = vadd.f32 %v871, %v983
    %v985 = vpop.f32.mrb[0].mxu0
    %v986 = vadd.f32 %v873, %v985
    %v987 = vpop.f32.mrb[0].mxu0
    %v988 = vadd.f32 %v875, %v987
    %v989 = vpop.f32.mrb[0].mxu0
    %v990 = vadd.f32 %v877, %v989
    %991 = vdwg.mxu0
    %v992 = vmax.f32 %v914, 0.0
    %v993 = vmax.f32 %v916, 0.0
    %v994 = vmax.f32 %v918, 0.0
    %v995 = vmax.f32 %v920, 0.0
    %v996 = vmax.f32 %v924, 0.0
    %v997 = vmax.f32 %v926, 0.0
    %v998 = vmax.f32 %v928, 0.0
    %v999 = vmax.f32 %v930, 0.0
    %v1000 = vmax.f32 %v934, 0.0
    %v1001 = vmax.f32 %v936, 0.0
    %v1002 = vmax.f32 %v938, 0.0
    %v1003 = vmax.f32 %v940, 0.0
    %v1004 = vmax.f32 %v944, 0.0
    %v1005 = vmax.f32 %v946, 0.0
    %v1006 = vmax.f32 %v948, 0.0
    %v1007 = vmax.f32 %v950, 0.0
    %v1008 = vmax.f32 %v954, 0.0
    %v1009 = vmax.f32 %v956, 0.0
    %v1010 = vmax.f32 %v958, 0.0
    %v1011 = vmax.f32 %v960, 0.0
    %v1012 = vmax.f32 %v964, 0.0
    %v1013 = vmax.f32 %v966, 0.0
    %v1014 = vmax.f32 %v968, 0.0
    %v1015 = vmax.f32 %v970, 0.0
    %v1016 = vmax.f32 %v974, 0.0
    %v1017 = vmax.f32 %v976, 0.0
    %v1018 = vmax.f32 %v978, 0.0
    %v1019 = vmax.f32 %v980, 0.0
    %v1020 = vmax.f32 %v984, 0.0
    %v1021 = vmax.f32 %v986, 0.0
    %v1022 = vmax.f32 %v988, 0.0
    %v1023 = vmax.f32 %v990, 0.0
    %v1024 = vpack.c.bf16 %v994, %v992
    %v1025 = vpack.c.bf16 %v995, %v993
    %v1026 = vpack.c.bf16 %v998, %v996
    %v1027 = vpack.c.bf16 %v999, %v997
    %v1028 = vpack.c.bf16 %v1002, %v1000
    %v1029 = vpack.c.bf16 %v1003, %v1001
    %v1030 = vpack.c.bf16 %v1006, %v1004
    %v1031 = vpack.c.bf16 %v1007, %v1005
    %v1032 = vpack.c.bf16 %v1010, %v1008
    %v1033 = vpack.c.bf16 %v1011, %v1009
    %v1034 = vpack.c.bf16 %v1014, %v1012
    %v1035 = vpack.c.bf16 %v1015, %v1013
    %v1036 = vpack.c.bf16 %v1018, %v1016
    %v1037 = vpack.c.bf16 %v1019, %v1017
    %v1038 = vpack.c.bf16 %v1022, %v1020
    %v1039 = vpack.c.bf16 %v1023, %v1021
    %v1040 = vld [vmem:[#allocation8] sm:$0xff]
    %v1041 = vld [vmem:[#allocation8 + $0x8] sm:$0xff]
    %v1042 = vld [vmem:[#allocation8 + $0x10] sm:$0xff]
    %v1043 = vld [vmem:[#allocation8 + $0x18] sm:$0xff]
    %v1044 = vld [vmem:[#allocation8 + $0x20] sm:$0xff]
    %v1045 = vld [vmem:[#allocation8 + $0x28] sm:$0xff]
    %v1046 = vld [vmem:[#allocation8 + $0x30] sm:$0xff]
    %v1047 = vld [vmem:[#allocation8 + $0x38] sm:$0xff]
    %v1048 = vld [vmem:[#allocation8 + $0x40] sm:$0xff]
    %v1049 = vld [vmem:[#allocation8 + $0x48] sm:$0xff]
    %v1050 = vld [vmem:[#allocation8 + $0x50] sm:$0xff]
    %v1051 = vld [vmem:[#allocation8 + $0x58] sm:$0xff]
    %v1052 = vld [vmem:[#allocation8 + $0x60] sm:$0xff]
    %v1053 = vld [vmem:[#allocation8 + $0x68] sm:$0xff]
    %v1054 = vld [vmem:[#allocation8 + $0x70] sm:$0xff]
    %v1055 = vld [vmem:[#allocation8 + $0x78] sm:$0xff]
    %v1056 = vld [vmem:[#allocation8 + $0x80] sm:$0xff]
    %v1057 = vld [vmem:[#allocation8 + $0x88] sm:$0xff]
    %v1058 = vld [vmem:[#allocation8 + $0x90] sm:$0xff]
    %v1059 = vld [vmem:[#allocation8 + $0x98] sm:$0xff]
    %v1060 = vld [vmem:[#allocation8 + $0xa0] sm:$0xff]
    %v1061 = vld [vmem:[#allocation8 + $0xa8] sm:$0xff]
    %v1062 = vld [vmem:[#allocation8 + $0xb0] sm:$0xff]
    %v1063 = vld [vmem:[#allocation8 + $0xb8] sm:$0xff]
    %v1064 = vld [vmem:[#allocation8 + $0xc0] sm:$0xff]
    %v1065 = vld [vmem:[#allocation8 + $0xc8] sm:$0xff]
    %v1066 = vld [vmem:[#allocation8 + $0xd0] sm:$0xff]
    %v1067 = vld [vmem:[#allocation8 + $0xd8] sm:$0xff]
    %v1068 = vld [vmem:[#allocation8 + $0xe0] sm:$0xff]
    %v1069 = vld [vmem:[#allocation8 + $0xe8] sm:$0xff]
    %v1070 = vld [vmem:[#allocation8 + $0xf0] sm:$0xff]
    %v1071 = vld [vmem:[#allocation8 + $0xf8] sm:$0xff]
    %v1072 = vld [vmem:[#allocation10] sm:$0x3]
    %v1074 = vlaneseq
    %v1075 = vshrl.u32 %v1074, 7
    %v1076 = vsub.s32 0, %v1075
    %v1077 = vrot.slane %v1072, %v1076
    %v1078 = vlaneseq
    %v1079 = vshrl.u32 %v1078, 7
    %v1080 = vsub.s32 1, %v1079
    %v1081 = vrot.slane %v1072, %v1080
    %v1116 = vunpack.c.l.b16 %v1040
    %v1117 = vunpack.c.h.b16 %v1040
    %v1118 = vunpack.c.l.b16 %v1041
    %v1119 = vunpack.c.h.b16 %v1041
    %v1120 = vunpack.c.l.b16 %v1042
    %v1121 = vunpack.c.h.b16 %v1042
    %v1122 = vunpack.c.l.b16 %v1043
    %v1123 = vunpack.c.h.b16 %v1043
    %v1124 = vunpack.c.l.b16 %v1044
    %v1125 = vunpack.c.h.b16 %v1044
    %v1126 = vunpack.c.l.b16 %v1045
    %v1127 = vunpack.c.h.b16 %v1045
    %v1128 = vunpack.c.l.b16 %v1046
    %v1129 = vunpack.c.h.b16 %v1046
    %v1130 = vunpack.c.l.b16 %v1047
    %v1131 = vunpack.c.h.b16 %v1047
    %v1132 = vunpack.c.l.b16 %v1048
    %v1133 = vunpack.c.h.b16 %v1048
    %v1134 = vunpack.c.l.b16 %v1049
    %v1135 = vunpack.c.h.b16 %v1049
    %v1136 = vunpack.c.l.b16 %v1050
    %v1137 = vunpack.c.h.b16 %v1050
    %v1138 = vunpack.c.l.b16 %v1051
    %v1139 = vunpack.c.h.b16 %v1051
    %v1140 = vunpack.c.l.b16 %v1052
    %v1141 = vunpack.c.h.b16 %v1052
    %v1142 = vunpack.c.l.b16 %v1053
    %v1143 = vunpack.c.h.b16 %v1053
    %v1144 = vunpack.c.l.b16 %v1054
    %v1145 = vunpack.c.h.b16 %v1054
    %v1146 = vunpack.c.l.b16 %v1055
    %v1147 = vunpack.c.h.b16 %v1055
    %v1148 = vunpack.c.l.b16 %v1056
    %v1149 = vunpack.c.h.b16 %v1056
    %v1150 = vunpack.c.l.b16 %v1057
    %v1151 = vunpack.c.h.b16 %v1057
    %v1152 = vunpack.c.l.b16 %v1058
    %v1153 = vunpack.c.h.b16 %v1058
    %v1154 = vunpack.c.l.b16 %v1059
    %v1155 = vunpack.c.h.b16 %v1059
    %v1156 = vunpack.c.l.b16 %v1060
    %v1157 = vunpack.c.h.b16 %v1060
    %v1158 = vunpack.c.l.b16 %v1061
    %v1159 = vunpack.c.h.b16 %v1061
    %v1160 = vunpack.c.l.b16 %v1062
    %v1161 = vunpack.c.h.b16 %v1062
    %v1162 = vunpack.c.l.b16 %v1063
    %v1163 = vunpack.c.h.b16 %v1063
    %v1164 = vunpack.c.l.b16 %v1064
    %v1165 = vunpack.c.h.b16 %v1064
    %v1166 = vunpack.c.l.b16 %v1065
    %v1167 = vunpack.c.h.b16 %v1065
    %v1168 = vunpack.c.l.b16 %v1066
    %v1169 = vunpack.c.h.b16 %v1066
    %v1170 = vunpack.c.l.b16 %v1067
    %v1171 = vunpack.c.h.b16 %v1067
    %v1172 = vunpack.c.l.b16 %v1068
    %v1173 = vunpack.c.h.b16 %v1068
    %v1174 = vunpack.c.l.b16 %v1069
    %v1175 = vunpack.c.h.b16 %v1069
    %v1176 = vunpack.c.l.b16 %v1070
    %v1177 = vunpack.c.h.b16 %v1070
    %v1178 = vunpack.c.l.b16 %v1071
    %v1179 = vunpack.c.h.b16 %v1071
    %v1180 = vpack.c.b16 %v1118, %v1116
    %v1181 = vpack.c.b16 %v1119, %v1117
    %v1182 = vpack.c.b16 %v1122, %v1120
    %v1183 = vpack.c.b16 %v1123, %v1121
    %v1184 = vpack.c.b16 %v1126, %v1124
    %v1185 = vpack.c.b16 %v1127, %v1125
    %v1186 = vpack.c.b16 %v1130, %v1128
    %v1187 = vpack.c.b16 %v1131, %v1129
    %v1188 = vpack.c.b16 %v1134, %v1132
    %v1189 = vpack.c.b16 %v1135, %v1133
    %v1190 = vpack.c.b16 %v1138, %v1136
    %v1191 = vpack.c.b16 %v1139, %v1137
    %v1192 = vpack.c.b16 %v1142, %v1140
    %v1193 = vpack.c.b16 %v1143, %v1141
    %v1194 = vpack.c.b16 %v1146, %v1144
    %v1195 = vpack.c.b16 %v1147, %v1145
    %v1196 = vpack.c.b16 %v1150, %v1148
    %v1197 = vpack.c.b16 %v1151, %v1149
    %v1198 = vpack.c.b16 %v1154, %v1152
    %v1199 = vpack.c.b16 %v1155, %v1153
    %v1200 = vpack.c.b16 %v1158, %v1156
    %v1201 = vpack.c.b16 %v1159, %v1157
    %v1202 = vpack.c.b16 %v1162, %v1160
    %v1203 = vpack.c.b16 %v1163, %v1161
    %v1204 = vpack.c.b16 %v1166, %v1164
    %v1205 = vpack.c.b16 %v1167, %v1165
    %v1206 = vpack.c.b16 %v1170, %v1168
    %v1207 = vpack.c.b16 %v1171, %v1169
    %v1208 = vpack.c.b16 %v1174, %v1172
    %v1209 = vpack.c.b16 %v1175, %v1173
    %v1210 = vpack.c.b16 %v1178, %v1176
    %v1211 = vpack.c.b16 %v1179, %v1177
    %1244 = vmatprep.subr.bf16.mxu0 %v1181
    %1245 = vmatpush1.bf16.msra.mxu0 %v1180
    %1246 = vmatprep.subr.bf16.mxu0 %v1183
    %1247 = vmatpush1.bf16.msra.mxu0 %v1182
    %1248 = vmatprep.subr.bf16.mxu0 %v1185
    %1249 = vmatpush1.bf16.msra.mxu0 %v1184
    %1250 = vmatprep.subr.bf16.mxu0 %v1187
    %1251 = vmatpush1.bf16.msra.mxu0 %v1186
    %1252 = vmatprep.subr.bf16.mxu0 %v1189
    %1253 = vmatpush1.bf16.msra.mxu0 %v1188
    %1254 = vmatprep.subr.bf16.mxu0 %v1191
    %1255 = vmatpush1.bf16.msra.mxu0 %v1190
    %1256 = vmatprep.subr.bf16.mxu0 %v1193
    %1257 = vmatpush1.bf16.msra.mxu0 %v1192
    %1258 = vmatprep.subr.bf16.mxu0 %v1195
    %1259 = vmatpush1.bf16.msra.mxu0 %v1194
    %1260 = vmatprep.subr.bf16.mxu0 %v1197
    %1261 = vmatpush1.bf16.msra.mxu0 %v1196
    %1262 = vmatprep.subr.bf16.mxu0 %v1199
    %1263 = vmatpush1.bf16.msra.mxu0 %v1198
    %1264 = vmatprep.subr.bf16.mxu0 %v1201
    %1265 = vmatpush1.bf16.msra.mxu0 %v1200
    %1266 = vmatprep.subr.bf16.mxu0 %v1203
    %1267 = vmatpush1.bf16.msra.mxu0 %v1202
    %1268 = vmatprep.subr.bf16.mxu0 %v1205
    %1269 = vmatpush1.bf16.msra.mxu0 %v1204
    %1270 = vmatprep.subr.bf16.mxu0 %v1207
    %1271 = vmatpush1.bf16.msra.mxu0 %v1206
    %1272 = vmatprep.subr.bf16.mxu0 %v1209
    %1273 = vmatpush1.bf16.msra.mxu0 %v1208
    %1274 = vmatprep.subr.bf16.mxu0 %v1211
    %1275 = vmatpush1.bf16.msra.mxu0 %v1210
    %1276 = vmatprep.mubr.bf16.mxu0 %v1025
    %1277 = vmatmul.mubr.bf16.gmra.mrb[0].mxu0 %v1024
    %v1278 = vpop.f32.mrb[0].mxu0
    %v1279 = vadd.f32 %v1077, %v1278
    %v1280 = vpop.f32.mrb[0].mxu0
    %v1281 = vadd.f32 %v1081, %v1280
    %v1282 = vpop.f32.mrb[0].mxu0
    %v1283 = vadd.f32 %v1077, %v1282
    %v1284 = vpop.f32.mrb[0].mxu0
    %v1285 = vadd.f32 %v1081, %v1284
    %1286 = vmatprep.mubr.bf16.mxu0 %v1027
    %1287 = vmatmul.mubr.bf16.gmra.mrb[0].mxu0 %v1026
    %v1288 = vpop.f32.mrb[0].mxu0
    %v1289 = vadd.f32 %v1077, %v1288
    %v1290 = vpop.f32.mrb[0].mxu0
    %v1291 = vadd.f32 %v1081, %v1290
    %v1292 = vpop.f32.mrb[0].mxu0
    %v1293 = vadd.f32 %v1077, %v1292
    %v1294 = vpop.f32.mrb[0].mxu0
    %v1295 = vadd.f32 %v1081, %v1294
    %1296 = vmatprep.mubr.bf16.mxu0 %v1029
    %1297 = vmatmul.mubr.bf16.gmra.mrb[0].mxu0 %v1028
    %v1298 = vpop.f32.mrb[0].mxu0
    %v1299 = vadd.f32 %v1077, %v1298
    %v1300 = vpop.f32.mrb[0].mxu0
    %v1301 = vadd.f32 %v1081, %v1300
    %v1302 = vpop.f32.mrb[0].mxu0
    %v1303 = vadd.f32 %v1077, %v1302
    %v1304 = vpop.f32.mrb[0].mxu0
    %v1305 = vadd.f32 %v1081, %v1304
    %1306 = vmatprep.mubr.bf16.mxu0 %v1031
    %1307 = vmatmul.mubr.bf16.gmra.mrb[0].mxu0 %v1030
    %v1308 = vpop.f32.mrb[0].mxu0
    %v1309 = vadd.f32 %v1077, %v1308
    %v1310 = vpop.f32.mrb[0].mxu0
    %v1311 = vadd.f32 %v1081, %v1310
    %v1312 = vpop.f32.mrb[0].mxu0
    %v1313 = vadd.f32 %v1077, %v1312
    %v1314 = vpop.f32.mrb[0].mxu0
    %v1315 = vadd.f32 %v1081, %v1314
    %1316 = vmatprep.mubr.bf16.mxu0 %v1033
    %1317 = vmatmul.mubr.bf16.gmra.mrb[0].mxu0 %v1032
    %v1318 = vpop.f32.mrb[0].mxu0
    %v1319 = vadd.f32 %v1077, %v1318
    %v1320 = vpop.f32.mrb[0].mxu0
    %v1321 = vadd.f32 %v1081, %v1320
    %v1322 = vpop.f32.mrb[0].mxu0
    %v1323 = vadd.f32 %v1077, %v1322
    %v1324 = vpop.f32.mrb[0].mxu0
    %v1325 = vadd.f32 %v1081, %v1324
    %1326 = vmatprep.mubr.bf16.mxu0 %v1035
    %1327 = vmatmul.mubr.bf16.gmra.mrb[0].mxu0 %v1034
    %v1328 = vpop.f32.mrb[0].mxu0
    %v1329 = vadd.f32 %v1077, %v1328
    %v1330 = vpop.f32.mrb[0].mxu0
    %v1331 = vadd.f32 %v1081, %v1330
    %v1332 = vpop.f32.mrb[0].mxu0
    %v1333 = vadd.f32 %v1077, %v1332
    %v1334 = vpop.f32.mrb[0].mxu0
    %v1335 = vadd.f32 %v1081, %v1334
    %1336 = vmatprep.mubr.bf16.mxu0 %v1037
    %1337 = vmatmul.mubr.bf16.gmra.mrb[0].mxu0 %v1036
    %v1338 = vpop.f32.mrb[0].mxu0
    %v1339 = vadd.f32 %v1077, %v1338
    %v1340 = vpop.f32.mrb[0].mxu0
    %v1341 = vadd.f32 %v1081, %v1340
    %v1342 = vpop.f32.mrb[0].mxu0
    %v1343 = vadd.f32 %v1077, %v1342
    %v1344 = vpop.f32.mrb[0].mxu0
    %v1345 = vadd.f32 %v1081, %v1344
    %1346 = vmatprep.mubr.bf16.mxu0 %v1039
    %1347 = vmatmul.mubr.bf16.gmra.mrb[0].mxu0 %v1038
    %v1348 = vpop.f32.mrb[0].mxu0
    %v1349 = vadd.f32 %v1077, %v1348
    %v1350 = vpop.f32.mrb[0].mxu0
    %v1351 = vadd.f32 %v1081, %v1350
    %v1352 = vpop.f32.mrb[0].mxu0
    %v1353 = vadd.f32 %v1077, %v1352
    %v1354 = vpop.f32.mrb[0].mxu0
    %v1355 = vadd.f32 %v1081, %v1354
    %1356 = vdwg.mxu0
    %v1357 = vmax.f32 %v1279, 0.0
    %v1358 = vmax.f32 %v1281, 0.0
    %v1359 = vmax.f32 %v1283, 0.0
    %v1360 = vmax.f32 %v1285, 0.0
    %v1361 = vmax.f32 %v1289, 0.0
    %v1362 = vmax.f32 %v1291, 0.0
    %v1363 = vmax.f32 %v1293, 0.0
    %v1364 = vmax.f32 %v1295, 0.0
    %v1365 = vmax.f32 %v1299, 0.0
    %v1366 = vmax.f32 %v1301, 0.0
    %v1367 = vmax.f32 %v1303, 0.0
    %v1368 = vmax.f32 %v1305, 0.0
    %v1369 = vmax.f32 %v1309, 0.0
    %v1370 = vmax.f32 %v1311, 0.0
    %v1371 = vmax.f32 %v1313, 0.0
    %v1372 = vmax.f32 %v1315, 0.0
    %v1373 = vmax.f32 %v1319, 0.0
    %v1374 = vmax.f32 %v1321, 0.0
    %v1375 = vmax.f32 %v1323, 0.0
    %v1376 = vmax.f32 %v1325, 0.0
    %v1377 = vmax.f32 %v1329, 0.0
    %v1378 = vmax.f32 %v1331, 0.0
    %v1379 = vmax.f32 %v1333, 0.0
    %v1380 = vmax.f32 %v1335, 0.0
    %v1381 = vmax.f32 %v1339, 0.0
    %v1382 = vmax.f32 %v1341, 0.0
    %v1383 = vmax.f32 %v1343, 0.0
    %v1384 = vmax.f32 %v1345, 0.0
    %v1385 = vmax.f32 %v1349, 0.0
    %v1386 = vmax.f32 %v1351, 0.0
    %v1387 = vmax.f32 %v1353, 0.0
    %v1388 = vmax.f32 %v1355, 0.0
    %v1389 = vpack.c.bf16 %v1359, %v1357
    %v1390 = vpack.c.bf16 %v1360, %v1358
    %v1391 = vpack.c.bf16 %v1363, %v1361
    %v1392 = vpack.c.bf16 %v1364, %v1362
    %v1393 = vpack.c.bf16 %v1367, %v1365
    %v1394 = vpack.c.bf16 %v1368, %v1366
    %v1395 = vpack.c.bf16 %v1371, %v1369
    %v1396 = vpack.c.bf16 %v1372, %v1370
    %v1397 = vpack.c.bf16 %v1375, %v1373
    %v1398 = vpack.c.bf16 %v1376, %v1374
    %v1399 = vpack.c.bf16 %v1379, %v1377
    %v1400 = vpack.c.bf16 %v1380, %v1378
    %v1401 = vpack.c.bf16 %v1383, %v1381
    %v1402 = vpack.c.bf16 %v1384, %v1382
    %v1403 = vpack.c.bf16 %v1387, %v1385
    %v1404 = vpack.c.bf16 %v1388, %v1386
    %v1405 = vld [vmem:[#allocation11] sm:$0xff]
    %v1406 = vld [vmem:[#allocation11 + $0x8] sm:$0xff]
    %v1407 = vld [vmem:[#allocation11 + $0x10] sm:$0xff]
    %v1408 = vld [vmem:[#allocation11 + $0x18] sm:$0xff]
    %v1409 = vld [vmem:[#allocation11 + $0x20] sm:$0xff]
    %v1410 = vld [vmem:[#allocation11 + $0x28] sm:$0xff]
    %v1411 = vld [vmem:[#allocation11 + $0x30] sm:$0xff]
    %v1412 = vld [vmem:[#allocation11 + $0x38] sm:$0xff]
    %v1413 = vld [vmem:[#allocation11 + $0x40] sm:$0xff]
    %v1414 = vld [vmem:[#allocation11 + $0x48] sm:$0xff]
    %v1415 = vld [vmem:[#allocation11 + $0x50] sm:$0xff]
    %v1416 = vld [vmem:[#allocation11 + $0x58] sm:$0xff]
    %v1417 = vld [vmem:[#allocation11 + $0x60] sm:$0xff]
    %v1418 = vld [vmem:[#allocation11 + $0x68] sm:$0xff]
    %v1419 = vld [vmem:[#allocation11 + $0x70] sm:$0xff]
    %v1420 = vld [vmem:[#allocation11 + $0x78] sm:$0xff]
    %v1421 = vld [vmem:[#allocation11 + $0x80] sm:$0xff]
    %v1422 = vld [vmem:[#allocation11 + $0x88] sm:$0xff]
    %v1423 = vld [vmem:[#allocation11 + $0x90] sm:$0xff]
    %v1424 = vld [vmem:[#allocation11 + $0x98] sm:$0xff]
    %v1425 = vld [vmem:[#allocation11 + $0xa0] sm:$0xff]
    %v1426 = vld [vmem:[#allocation11 + $0xa8] sm:$0xff]
    %v1427 = vld [vmem:[#allocation11 + $0xb0] sm:$0xff]
    %v1428 = vld [vmem:[#allocation11 + $0xb8] sm:$0xff]
    %v1429 = vld [vmem:[#allocation11 + $0xc0] sm:$0xff]
    %v1430 = vld [vmem:[#allocation11 + $0xc8] sm:$0xff]
    %v1431 = vld [vmem:[#allocation11 + $0xd0] sm:$0xff]
    %v1432 = vld [vmem:[#allocation11 + $0xd8] sm:$0xff]
    %v1433 = vld [vmem:[#allocation11 + $0xe0] sm:$0xff]
    %v1434 = vld [vmem:[#allocation11 + $0xe8] sm:$0xff]
    %v1435 = vld [vmem:[#allocation11 + $0xf0] sm:$0xff]
    %v1436 = vld [vmem:[#allocation11 + $0xf8] sm:$0xff]
    %v1437 = vld [vmem:[#allocation13] sm:$0x3]
    %v1439 = vlaneseq
    %v1440 = vshrl.u32 %v1439, 7
    %v1441 = vsub.s32 0, %v1440
    %v1442 = vrot.slane %v1437, %v1441
    %v1443 = vlaneseq
    %v1444 = vshrl.u32 %v1443, 7
    %v1445 = vsub.s32 1, %v1444
    %v1446 = vrot.slane %v1437, %v1445
    %v1481 = vunpack.c.l.b16 %v1405
    %v1482 = vunpack.c.h.b16 %v1405
    %v1483 = vunpack.c.l.b16 %v1406
    %v1484 = vunpack.c.h.b16 %v1406
    %v1485 = vunpack.c.l.b16 %v1407
    %v1486 = vunpack.c.h.b16 %v1407
    %v1487 = vunpack.c.l.b16 %v1408
    %v1488 = vunpack.c.h.b16 %v1408
    %v1489 = vunpack.c.l.b16 %v1409
    %v1490 = vunpack.c.h.b16 %v1409
    %v1491 = vunpack.c.l.b16 %v1410
    %v1492 = vunpack.c.h.b16 %v1410
    %v1493 = vunpack.c.l.b16 %v1411
    %v1494 = vunpack.c.h.b16 %v1411
    %v1495 = vunpack.c.l.b16 %v1412
    %v1496 = vunpack.c.h.b16 %v1412
    %v1497 = vunpack.c.l.b16 %v1413
    %v1498 = vunpack.c.h.b16 %v1413
    %v1499 = vunpack.c.l.b16 %v1414
    %v1500 = vunpack.c.h.b16 %v1414
    %v1501 = vunpack.c.l.b16 %v1415
    %v1502 = vunpack.c.h.b16 %v1415
    %v1503 = vunpack.c.l.b16 %v1416
    %v1504 = vunpack.c.h.b16 %v1416
    %v1505 = vunpack.c.l.b16 %v1417
    %v1506 = vunpack.c.h.b16 %v1417
    %v1507 = vunpack.c.l.b16 %v1418
    %v1508 = vunpack.c.h.b16 %v1418
    %v1509 = vunpack.c.l.b16 %v1419
    %v1510 = vunpack.c.h.b16 %v1419
    %v1511 = vunpack.c.l.b16 %v1420
    %v1512 = vunpack.c.h.b16 %v1420
    %v1513 = vunpack.c.l.b16 %v1421
    %v1514 = vunpack.c.h.b16 %v1421
    %v1515 = vunpack.c.l.b16 %v1422
    %v1516 = vunpack.c.h.b16 %v1422
    %v1517 = vunpack.c.l.b16 %v1423
    %v1518 = vunpack.c.h.b16 %v1423
    %v1519 = vunpack.c.l.b16 %v1424
    %v1520 = vunpack.c.h.b16 %v1424
    %v1521 = vunpack.c.l.b16 %v1425
    %v1522 = vunpack.c.h.b16 %v1425
    %v1523 = vunpack.c.l.b16 %v1426
    %v1524 = vunpack.c.h.b16 %v1426
    %v1525 = vunpack.c.l.b16 %v1427
    %v1526 = vunpack.c.h.b16 %v1427
    %v1527 = vunpack.c.l.b16 %v1428
    %v1528 = vunpack.c.h.b16 %v1428
    %v1529 = vunpack.c.l.b16 %v1429
    %v1530 = vunpack.c.h.b16 %v1429
    %v1531 = vunpack.c.l.b16 %v1430
    %v1532 = vunpack.c.h.b16 %v1430
    %v1533 = vunpack.c.l.b16 %v1431
    %v1534 = vunpack.c.h.b16 %v1431
    %v1535 = vunpack.c.l.b16 %v1432
    %v1536 = vunpack.c.h.b16 %v1432
    %v1537 = vunpack.c.l.b16 %v1433
    %v1538 = vunpack.c.h.b16 %v1433
    %v1539 = vunpack.c.l.b16 %v1434
    %v1540 = vunpack.c.h.b16 %v1434
    %v1541 = vunpack.c.l.b16 %v1435
    %v1542 = vunpack.c.h.b16 %v1435
    %v1543 = vunpack.c.l.b16 %v1436
    %v1544 = vunpack.c.h.b16 %v1436
    %v1545 = vpack.c.b16 %v1483, %v1481
    %v1546 = vpack.c.b16 %v1484, %v1482
    %v1547 = vpack.c.b16 %v1487, %v1485
    %v1548 = vpack.c.b16 %v1488, %v1486
    %v1549 = vpack.c.b16 %v1491, %v1489
    %v1550 = vpack.c.b16 %v1492, %v1490
    %v1551 = vpack.c.b16 %v1495, %v1493
    %v1552 = vpack.c.b16 %v1496, %v1494
    %v1553 = vpack.c.b16 %v1499, %v1497
    %v1554 = vpack.c.b16 %v1500, %v1498
    %v1555 = vpack.c.b16 %v1503, %v1501
    %v1556 = vpack.c.b16 %v1504, %v1502
    %v1557 = vpack.c.b16 %v1507, %v1505
    %v1558 = vpack.c.b16 %v1508, %v1506
    %v1559 = vpack.c.b16 %v1511, %v1509
    %v1560 = vpack.c.b16 %v1512, %v1510
    %v1561 = vpack.c.b16 %v1515, %v1513
    %v1562 = vpack.c.b16 %v1516, %v1514
    %v1563 = vpack.c.b16 %v1519, %v1517
    %v1564 = vpack.c.b16 %v1520, %v1518
    %v1565 = vpack.c.b16 %v1523, %v1521
    %v1566 = vpack.c.b16 %v1524, %v1522
    %v1567 = vpack.c.b16 %v1527, %v1525
    %v1568 = vpack.c.b16 %v1528, %v1526
    %v1569 = vpack.c.b16 %v1531, %v1529
    %v1570 = vpack.c.b16 %v1532, %v1530
    %v1571 = vpack.c.b16 %v1535, %v1533
    %v1572 = vpack.c.b16 %v1536, %v1534
    %v1573 = vpack.c.b16 %v1539, %v1537
    %v1574 = vpack.c.b16 %v1540, %v1538
    %v1575 = vpack.c.b16 %v1543, %v1541
    %v1576 = vpack.c.b16 %v1544, %v1542
    %1609 = vmatprep.subr.bf16.mxu0 %v1546
    %1610 = vmatpush1.bf16.msra.mxu0 %v1545
    %1611 = vmatprep.subr.bf16.mxu0 %v1548
    %1612 = vmatpush1.bf16.msra.mxu0 %v1547
    %1613 = vmatprep.subr.bf16.mxu0 %v1550
    %1614 = vmatpush1.bf16.msra.mxu0 %v1549
    %1615 = vmatprep.subr.bf16.mxu0 %v1552
    %1616 = vmatpush1.bf16.msra.mxu0 %v1551
    %1617 = vmatprep.subr.bf16.mxu0 %v1554
    %1618 = vmatpush1.bf16.msra.mxu0 %v1553
    %1619 = vmatprep.subr.bf16.mxu0 %v1556
    %1620 = vmatpush1.bf16.msra.mxu0 %v1555
    %1621 = vmatprep.subr.bf16.mxu0 %v1558
    %1622 = vmatpush1.bf16.msra.mxu0 %v1557
    %1623 = vmatprep.subr.bf16.mxu0 %v1560
    %1624 = vmatpush1.bf16.msra.mxu0 %v1559
    %1625 = vmatprep.subr.bf16.mxu0 %v1562
    %1626 = vmatpush1.bf16.msra.mxu0 %v1561
    %1627 = vmatprep.subr.bf16.mxu0 %v1564
    %1628 = vmatpush1.bf16.msra.mxu0 %v1563
    %1629 = vmatprep.subr.bf16.mxu0 %v1566
    %1630 = vmatpush1.bf16.msra.mxu0 %v1565
    %1631 = vmatprep.subr.bf16.mxu0 %v1568
    %1632 = vmatpush1.bf16.msra.mxu0 %v1567
    %1633 = vmatprep.subr.bf16.mxu0 %v1570
    %1634 = vmatpush1.bf16.msra.mxu0 %v1569
    %1635 = vmatprep.subr.bf16.mxu0 %v1572
    %1636 = vmatpush1.bf16.msra.mxu0 %v1571
    %1637 = vmatprep.subr.bf16.mxu0 %v1574
    %1638 = vmatpush1.bf16.msra.mxu0 %v1573
    %1639 = vmatprep.subr.bf16.mxu0 %v1576
    %1640 = vmatpush1.bf16.msra.mxu0 %v1575
    %1641 = vmatprep.mubr.bf16.mxu0 %v1390
    %1642 = vmatmul.mubr.bf16.gmra.mrb[0].mxu0 %v1389
    %v1643 = vpop.f32.mrb[0].mxu0
    %v1644 = vadd.f32 %v1442, %v1643
    %v1645 = vpop.f32.mrb[0].mxu0
    %v1646 = vadd.f32 %v1446, %v1645
    %v1647 = vpop.f32.mrb[0].mxu0
    %v1648 = vadd.f32 %v1442, %v1647
    %v1649 = vpop.f32.mrb[0].mxu0
    %v1650 = vadd.f32 %v1446, %v1649
    %1651 = vmatprep.mubr.bf16.mxu0 %v1392
    %1652 = vmatmul.mubr.bf16.gmra.mrb[0].mxu0 %v1391
    %v1653 = vpop.f32.mrb[0].mxu0
    %v1654 = vadd.f32 %v1442, %v1653
    %v1655 = vpop.f32.mrb[0].mxu0
    %v1656 = vadd.f32 %v1446, %v1655
    %v1657 = vpop.f32.mrb[0].mxu0
    %v1658 = vadd.f32 %v1442, %v1657
    %v1659 = vpop.f32.mrb[0].mxu0
    %v1660 = vadd.f32 %v1446, %v1659
    %1661 = vmatprep.mubr.bf16.mxu0 %v1394
    %1662 = vmatmul.mubr.bf16.gmra.mrb[0].mxu0 %v1393
    %v1663 = vpop.f32.mrb[0].mxu0
    %v1664 = vadd.f32 %v1442, %v1663
    %v1665 = vpop.f32.mrb[0].mxu0
    %v1666 = vadd.f32 %v1446, %v1665
    %v1667 = vpop.f32.mrb[0].mxu0
    %v1668 = vadd.f32 %v1442, %v1667
    %v1669 = vpop.f32.mrb[0].mxu0
    %v1670 = vadd.f32 %v1446, %v1669
    %1671 = vmatprep.mubr.bf16.mxu0 %v1396
    %1672 = vmatmul.mubr.bf16.gmra.mrb[0].mxu0 %v1395
    %v1673 = vpop.f32.mrb[0].mxu0
    %v1674 = vadd.f32 %v1442, %v1673
    %v1675 = vpop.f32.mrb[0].mxu0
    %v1676 = vadd.f32 %v1446, %v1675
    %v1677 = vpop.f32.mrb[0].mxu0
    %v1678 = vadd.f32 %v1442, %v1677
    %v1679 = vpop.f32.mrb[0].mxu0
    %v1680 = vadd.f32 %v1446, %v1679
    %1681 = vmatprep.mubr.bf16.mxu0 %v1398
    %1682 = vmatmul.mubr.bf16.gmra.mrb[0].mxu0 %v1397
    %v1683 = vpop.f32.mrb[0].mxu0
    %v1684 = vadd.f32 %v1442, %v1683
    %v1685 = vpop.f32.mrb[0].mxu0
    %v1686 = vadd.f32 %v1446, %v1685
    %v1687 = vpop.f32.mrb[0].mxu0
    %v1688 = vadd.f32 %v1442, %v1687
    %v1689 = vpop.f32.mrb[0].mxu0
    %v1690 = vadd.f32 %v1446, %v1689
    %1691 = vmatprep.mubr.bf16.mxu0 %v1400
    %1692 = vmatmul.mubr.bf16.gmra.mrb[0].mxu0 %v1399
    %v1693 = vpop.f32.mrb[0].mxu0
    %v1694 = vadd.f32 %v1442, %v1693
    %v1695 = vpop.f32.mrb[0].mxu0
    %v1696 = vadd.f32 %v1446, %v1695
    %v1697 = vpop.f32.mrb[0].mxu0
    %v1698 = vadd.f32 %v1442, %v1697
    %v1699 = vpop.f32.mrb[0].mxu0
    %v1700 = vadd.f32 %v1446, %v1699
    %1701 = vmatprep.mubr.bf16.mxu0 %v1402
    %1702 = vmatmul.mubr.bf16.gmra.mrb[0].mxu0 %v1401
    %v1703 = vpop.f32.mrb[0].mxu0
    %v1704 = vadd.f32 %v1442, %v1703
    %v1705 = vpop.f32.mrb[0].mxu0
    %v1706 = vadd.f32 %v1446, %v1705
    %v1707 = vpop.f32.mrb[0].mxu0
    %v1708 = vadd.f32 %v1442, %v1707
    %v1709 = vpop.f32.mrb[0].mxu0
    %v1710 = vadd.f32 %v1446, %v1709
    %1711 = vmatprep.mubr.bf16.mxu0 %v1404
    %1712 = vmatmul.mubr.bf16.gmra.mrb[0].mxu0 %v1403
    %v1713 = vpop.f32.mrb[0].mxu0
    %v1714 = vadd.f32 %v1442, %v1713
    %v1715 = vpop.f32.mrb[0].mxu0
    %v1716 = vadd.f32 %v1446, %v1715
    %v1717 = vpop.f32.mrb[0].mxu0
    %v1718 = vadd.f32 %v1442, %v1717
    %v1719 = vpop.f32.mrb[0].mxu0
    %v1720 = vadd.f32 %v1446, %v1719
    %1721 = vdwg.mxu0
    %v1722 = vmax.f32 %v1644, 0.0
    %v1723 = vmax.f32 %v1646, 0.0
    %v1724 = vmax.f32 %v1648, 0.0
    %v1725 = vmax.f32 %v1650, 0.0
    %v1726 = vmax.f32 %v1654, 0.0
    %v1727 = vmax.f32 %v1656, 0.0
    %v1728 = vmax.f32 %v1658, 0.0
    %v1729 = vmax.f32 %v1660, 0.0
    %v1730 = vmax.f32 %v1664, 0.0
    %v1731 = vmax.f32 %v1666, 0.0
    %v1732 = vmax.f32 %v1668, 0.0
    %v1733 = vmax.f32 %v1670, 0.0
    %v1734 = vmax.f32 %v1674, 0.0
    %v1735 = vmax.f32 %v1676, 0.0
    %v1736 = vmax.f32 %v1678, 0.0
    %v1737 = vmax.f32 %v1680, 0.0
    %v1738 = vmax.f32 %v1684, 0.0
    %v1739 = vmax.f32 %v1686, 0.0
    %v1740 = vmax.f32 %v1688, 0.0
    %v1741 = vmax.f32 %v1690, 0.0
    %v1742 = vmax.f32 %v1694, 0.0
    %v1743 = vmax.f32 %v1696, 0.0
    %v1744 = vmax.f32 %v1698, 0.0
    %v1745 = vmax.f32 %v1700, 0.0
    %v1746 = vmax.f32 %v1704, 0.0
    %v1747 = vmax.f32 %v1706, 0.0
    %v1748 = vmax.f32 %v1708, 0.0
    %v1749 = vmax.f32 %v1710, 0.0
    %v1750 = vmax.f32 %v1714, 0.0
    %v1751 = vmax.f32 %v1716, 0.0
    %v1752 = vmax.f32 %v1718, 0.0
    %v1753 = vmax.f32 %v1720, 0.0
    %v1754 = vpack.c.bf16 %v1724, %v1722
    %v1755 = vpack.c.bf16 %v1725, %v1723
    %v1756 = vpack.c.bf16 %v1728, %v1726
    %v1757 = vpack.c.bf16 %v1729, %v1727
    %v1758 = vpack.c.bf16 %v1732, %v1730
    %v1759 = vpack.c.bf16 %v1733, %v1731
    %v1760 = vpack.c.bf16 %v1736, %v1734
    %v1761 = vpack.c.bf16 %v1737, %v1735
    %v1762 = vpack.c.bf16 %v1740, %v1738
    %v1763 = vpack.c.bf16 %v1741, %v1739
    %v1764 = vpack.c.bf16 %v1744, %v1742
    %v1765 = vpack.c.bf16 %v1745, %v1743
    %v1766 = vpack.c.bf16 %v1748, %v1746
    %v1767 = vpack.c.bf16 %v1749, %v1747
    %v1768 = vpack.c.bf16 %v1752, %v1750
    %v1769 = vpack.c.bf16 %v1753, %v1751
    %v1770 = vld [vmem:[#allocation14] sm:$0xff]
    %v1771 = vld [vmem:[#allocation14 + $0x8] sm:$0xff]
    %v1772 = vld [vmem:[#allocation14 + $0x10] sm:$0xff]
    %v1773 = vld [vmem:[#allocation14 + $0x18] sm:$0xff]
    %v1774 = vld [vmem:[#allocation14 + $0x20] sm:$0xff]
    %v1775 = vld [vmem:[#allocation14 + $0x28] sm:$0xff]
    %v1776 = vld [vmem:[#allocation14 + $0x30] sm:$0xff]
    %v1777 = vld [vmem:[#allocation14 + $0x38] sm:$0xff]
    %v1778 = vld [vmem:[#allocation14 + $0x40] sm:$0xff]
    %v1779 = vld [vmem:[#allocation14 + $0x48] sm:$0xff]
    %v1780 = vld [vmem:[#allocation14 + $0x50] sm:$0xff]
    %v1781 = vld [vmem:[#allocation14 + $0x58] sm:$0xff]
    %v1782 = vld [vmem:[#allocation14 + $0x60] sm:$0xff]
    %v1783 = vld [vmem:[#allocation14 + $0x68] sm:$0xff]
    %v1784 = vld [vmem:[#allocation14 + $0x70] sm:$0xff]
    %v1785 = vld [vmem:[#allocation14 + $0x78] sm:$0xff]
    %v1786 = vld [vmem:[#allocation14 + $0x80] sm:$0xff]
    %v1787 = vld [vmem:[#allocation14 + $0x88] sm:$0xff]
    %v1788 = vld [vmem:[#allocation14 + $0x90] sm:$0xff]
    %v1789 = vld [vmem:[#allocation14 + $0x98] sm:$0xff]
    %v1790 = vld [vmem:[#allocation14 + $0xa0] sm:$0xff]
    %v1791 = vld [vmem:[#allocation14 + $0xa8] sm:$0xff]
    %v1792 = vld [vmem:[#allocation14 + $0xb0] sm:$0xff]
    %v1793 = vld [vmem:[#allocation14 + $0xb8] sm:$0xff]
    %v1794 = vld [vmem:[#allocation14 + $0xc0] sm:$0xff]
    %v1795 = vld [vmem:[#allocation14 + $0xc8] sm:$0xff]
    %v1796 = vld [vmem:[#allocation14 + $0xd0] sm:$0xff]
    %v1797 = vld [vmem:[#allocation14 + $0xd8] sm:$0xff]
    %v1798 = vld [vmem:[#allocation14 + $0xe0] sm:$0xff]
    %v1799 = vld [vmem:[#allocation14 + $0xe8] sm:$0xff]
    %v1800 = vld [vmem:[#allocation14 + $0xf0] sm:$0xff]
    %v1801 = vld [vmem:[#allocation14 + $0xf8] sm:$0xff]
    %v1802 = vld [vmem:[#allocation16] sm:$0x3]
    %v1804 = vlaneseq
    %v1805 = vshrl.u32 %v1804, 7
    %v1806 = vsub.s32 0, %v1805
    %v1807 = vrot.slane %v1802, %v1806
    %v1808 = vlaneseq
    %v1809 = vshrl.u32 %v1808, 7
    %v1810 = vsub.s32 1, %v1809
    %v1811 = vrot.slane %v1802, %v1810
    %v1846 = vunpack.c.l.b16 %v1770
    %v1847 = vunpack.c.h.b16 %v1770
    %v1848 = vunpack.c.l.b16 %v1771
    %v1849 = vunpack.c.h.b16 %v1771
    %v1850 = vunpack.c.l.b16 %v1772
    %v1851 = vunpack.c.h.b16 %v1772
    %v1852 = vunpack.c.l.b16 %v1773
    %v1853 = vunpack.c.h.b16 %v1773
    %v1854 = vunpack.c.l.b16 %v1774
    %v1855 = vunpack.c.h.b16 %v1774
    %v1856 = vunpack.c.l.b16 %v1775
    %v1857 = vunpack.c.h.b16 %v1775
    %v1858 = vunpack.c.l.b16 %v1776
    %v1859 = vunpack.c.h.b16 %v1776
    %v1860 = vunpack.c.l.b16 %v1777
    %v1861 = vunpack.c.h.b16 %v1777
    %v1862 = vunpack.c.l.b16 %v1778
    %v1863 = vunpack.c.h.b16 %v1778
    %v1864 = vunpack.c.l.b16 %v1779
    %v1865 = vunpack.c.h.b16 %v1779
    %v1866 = vunpack.c.l.b16 %v1780
    %v1867 = vunpack.c.h.b16 %v1780
    %v1868 = vunpack.c.l.b16 %v1781
    %v1869 = vunpack.c.h.b16 %v1781
    %v1870 = vunpack.c.l.b16 %v1782
    %v1871 = vunpack.c.h.b16 %v1782
    %v1872 = vunpack.c.l.b16 %v1783
    %v1873 = vunpack.c.h.b16 %v1783
    %v1874 = vunpack.c.l.b16 %v1784
    %v1875 = vunpack.c.h.b16 %v1784
    %v1876 = vunpack.c.l.b16 %v1785
    %v1877 = vunpack.c.h.b16 %v1785
    %v1878 = vunpack.c.l.b16 %v1786
    %v1879 = vunpack.c.h.b16 %v1786
    %v1880 = vunpack.c.l.b16 %v1787
    %v1881 = vunpack.c.h.b16 %v1787
    %v1882 = vunpack.c.l.b16 %v1788
    %v1883 = vunpack.c.h.b16 %v1788
    %v1884 = vunpack.c.l.b16 %v1789
    %v1885 = vunpack.c.h.b16 %v1789
    %v1886 = vunpack.c.l.b16 %v1790
    %v1887 = vunpack.c.h.b16 %v1790
    %v1888 = vunpack.c.l.b16 %v1791
    %v1889 = vunpack.c.h.b16 %v1791
    %v1890 = vunpack.c.l.b16 %v1792
    %v1891 = vunpack.c.h.b16 %v1792
    %v1892 = vunpack.c.l.b16 %v1793
    %v1893 = vunpack.c.h.b16 %v1793
    %v1894 = vunpack.c.l.b16 %v1794
    %v1895 = vunpack.c.h.b16 %v1794
    %v1896 = vunpack.c.l.b16 %v1795
    %v1897 = vunpack.c.h.b16 %v1795
    %v1898 = vunpack.c.l.b16 %v1796
    %v1899 = vunpack.c.h.b16 %v1796
    %v1900 = vunpack.c.l.b16 %v1797
    %v1901 = vunpack.c.h.b16 %v1797
    %v1902 = vunpack.c.l.b16 %v1798
    %v1903 = vunpack.c.h.b16 %v1798
    %v1904 = vunpack.c.l.b16 %v1799
    %v1905 = vunpack.c.h.b16 %v1799
    %v1906 = vunpack.c.l.b16 %v1800
    %v1907 = vunpack.c.h.b16 %v1800
    %v1908 = vunpack.c.l.b16 %v1801
    %v1909 = vunpack.c.h.b16 %v1801
    %v1910 = vpack.c.b16 %v1848, %v1846
    %v1911 = vpack.c.b16 %v1849, %v1847
    %v1912 = vpack.c.b16 %v1852, %v1850
    %v1913 = vpack.c.b16 %v1853, %v1851
    %v1914 = vpack.c.b16 %v1856, %v1854
    %v1915 = vpack.c.b16 %v1857, %v1855
    %v1916 = vpack.c.b16 %v1860, %v1858
    %v1917 = vpack.c.b16 %v1861, %v1859
    %v1918 = vpack.c.b16 %v1864, %v1862
    %v1919 = vpack.c.b16 %v1865, %v1863
    %v1920 = vpack.c.b16 %v1868, %v1866
    %v1921 = vpack.c.b16 %v1869, %v1867
    %v1922 = vpack.c.b16 %v1872, %v1870
    %v1923 = vpack.c.b16 %v1873, %v1871
    %v1924 = vpack.c.b16 %v1876, %v1874
    %v1925 = vpack.c.b16 %v1877, %v1875
    %v1926 = vpack.c.b16 %v1880, %v1878
    %v1927 = vpack.c.b16 %v1881, %v1879
    %v1928 = vpack.c.b16 %v1884, %v1882
    %v1929 = vpack.c.b16 %v1885, %v1883
    %v1930 = vpack.c.b16 %v1888, %v1886
    %v1931 = vpack.c.b16 %v1889, %v1887
    %v1932 = vpack.c.b16 %v1892, %v1890
    %v1933 = vpack.c.b16 %v1893, %v1891
    %v1934 = vpack.c.b16 %v1896, %v1894
    %v1935 = vpack.c.b16 %v1897, %v1895
    %v1936 = vpack.c.b16 %v1900, %v1898
    %v1937 = vpack.c.b16 %v1901, %v1899
    %v1938 = vpack.c.b16 %v1904, %v1902
    %v1939 = vpack.c.b16 %v1905, %v1903
    %v1940 = vpack.c.b16 %v1908, %v1906
    %v1941 = vpack.c.b16 %v1909, %v1907
    %1974 = vmatprep.subr.bf16.mxu0 %v1911
    %1975 = vmatpush1.bf16.msra.mxu0 %v1910
    %1976 = vmatprep.subr.bf16.mxu0 %v1913
    %1977 = vmatpush1.bf16.msra.mxu0 %v1912
    %1978 = vmatprep.subr.bf16.mxu0 %v1915
    %1979 = vmatpush1.bf16.msra.mxu0 %v1914
    %1980 = vmatprep.subr.bf16.mxu0 %v1917
    %1981 = vmatpush1.bf16.msra.mxu0 %v1916
    %1982 = vmatprep.subr.bf16.mxu0 %v1919
    %1983 = vmatpush1.bf16.msra.mxu0 %v1918
    %1984 = vmatprep.subr.bf16.mxu0 %v1921
    %1985 = vmatpush1.bf16.msra.mxu0 %v1920
    %1986 = vmatprep.subr.bf16.mxu0 %v1923
    %1987 = vmatpush1.bf16.msra.mxu0 %v1922
    %1988 = vmatprep.subr.bf16.mxu0 %v1925
    %1989 = vmatpush1.bf16.msra.mxu0 %v1924
    %1990 = vmatprep.subr.bf16.mxu0 %v1927
    %1991 = vmatpush1.bf16.msra.mxu0 %v1926
    %1992 = vmatprep.subr.bf16.mxu0 %v1929
    %1993 = vmatpush1.bf16.msra.mxu0 %v1928
    %1994 = vmatprep.subr.bf16.mxu0 %v1931
    %1995 = vmatpush1.bf16.msra.mxu0 %v1930
    %1996 = vmatprep.subr.bf16.mxu0 %v1933
    %1997 = vmatpush1.bf16.msra.mxu0 %v1932
    %1998 = vmatprep.subr.bf16.mxu0 %v1935
    %1999 = vmatpush1.bf16.msra.mxu0 %v1934
    %2000 = vmatprep.subr.bf16.mxu0 %v1937
    %2001 = vmatpush1.bf16.msra.mxu0 %v1936
    %2002 = vmatprep.subr.bf16.mxu0 %v1939
    %2003 = vmatpush1.bf16.msra.mxu0 %v1938
    %2004 = vmatprep.subr.bf16.mxu0 %v1941
    %2005 = vmatpush1.bf16.msra.mxu0 %v1940
    %2006 = vmatprep.mubr.bf16.mxu0 %v1755
    %2007 = vmatmul.mubr.bf16.gmra.mrb[0].mxu0 %v1754
    %v2008 = vpop.f32.mrb[0].mxu0
    %v2009 = vadd.f32 %v1807, %v2008
    %v2010 = vpop.f32.mrb[0].mxu0
    %v2011 = vadd.f32 %v1811, %v2010
    %v2012 = vpop.f32.mrb[0].mxu0
    %v2013 = vadd.f32 %v1807, %v2012
    %v2014 = vpop.f32.mrb[0].mxu0
    %v2015 = vadd.f32 %v1811, %v2014
    %2016 = vmatprep.mubr.bf16.mxu0 %v1757
    %2017 = vmatmul.mubr.bf16.gmra.mrb[0].mxu0 %v1756
    %v2018 = vpop.f32.mrb[0].mxu0
    %v2019 = vadd.f32 %v1807, %v2018
    %v2020 = vpop.f32.mrb[0].mxu0
    %v2021 = vadd.f32 %v1811, %v2020
    %v2022 = vpop.f32.mrb[0].mxu0
    %v2023 = vadd.f32 %v1807, %v2022
    %v2024 = vpop.f32.mrb[0].mxu0
    %v2025 = vadd.f32 %v1811, %v2024
    %2026 = vmatprep.mubr.bf16.mxu0 %v1759
    %2027 = vmatmul.mubr.bf16.gmra.mrb[0].mxu0 %v1758
    %v2028 = vpop.f32.mrb[0].mxu0
    %v2029 = vadd.f32 %v1807, %v2028
    %v2030 = vpop.f32.mrb[0].mxu0
    %v2031 = vadd.f32 %v1811, %v2030
    %v2032 = vpop.f32.mrb[0].mxu0
    %v2033 = vadd.f32 %v1807, %v2032
    %v2034 = vpop.f32.mrb[0].mxu0
    %v2035 = vadd.f32 %v1811, %v2034
    %2036 = vmatprep.mubr.bf16.mxu0 %v1761
    %2037 = vmatmul.mubr.bf16.gmra.mrb[0].mxu0 %v1760
    %v2038 = vpop.f32.mrb[0].mxu0
    %v2039 = vadd.f32 %v1807, %v2038
    %v2040 = vpop.f32.mrb[0].mxu0
    %v2041 = vadd.f32 %v1811, %v2040
    %v2042 = vpop.f32.mrb[0].mxu0
    %v2043 = vadd.f32 %v1807, %v2042
    %v2044 = vpop.f32.mrb[0].mxu0
    %v2045 = vadd.f32 %v1811, %v2044
    %2046 = vmatprep.mubr.bf16.mxu0 %v1763
    %2047 = vmatmul.mubr.bf16.gmra.mrb[0].mxu0 %v1762
    %v2048 = vpop.f32.mrb[0].mxu0
    %v2049 = vadd.f32 %v1807, %v2048
    %v2050 = vpop.f32.mrb[0].mxu0
    %v2051 = vadd.f32 %v1811, %v2050
    %v2052 = vpop.f32.mrb[0].mxu0
    %v2053 = vadd.f32 %v1807, %v2052
    %v2054 = vpop.f32.mrb[0].mxu0
    %v2055 = vadd.f32 %v1811, %v2054
    %2056 = vmatprep.mubr.bf16.mxu0 %v1765
    %2057 = vmatmul.mubr.bf16.gmra.mrb[0].mxu0 %v1764
    %v2058 = vpop.f32.mrb[0].mxu0
    %v2059 = vadd.f32 %v1807, %v2058
    %v2060 = vpop.f32.mrb[0].mxu0
    %v2061 = vadd.f32 %v1811, %v2060
    %v2062 = vpop.f32.mrb[0].mxu0
    %v2063 = vadd.f32 %v1807, %v2062
    %v2064 = vpop.f32.mrb[0].mxu0
    %v2065 = vadd.f32 %v1811, %v2064
    %2066 = vmatprep.mubr.bf16.mxu0 %v1767
    %2067 = vmatmul.mubr.bf16.gmra.mrb[0].mxu0 %v1766
    %v2068 = vpop.f32.mrb[0].mxu0
    %v2069 = vadd.f32 %v1807, %v2068
    %v2070 = vpop.f32.mrb[0].mxu0
    %v2071 = vadd.f32 %v1811, %v2070
    %v2072 = vpop.f32.mrb[0].mxu0
    %v2073 = vadd.f32 %v1807, %v2072
    %v2074 = vpop.f32.mrb[0].mxu0
    %v2075 = vadd.f32 %v1811, %v2074
    %2076 = vmatprep.mubr.bf16.mxu0 %v1769
    %2077 = vmatmul.mubr.bf16.gmra.mrb[0].mxu0 %v1768
    %v2078 = vpop.f32.mrb[0].mxu0
    %v2079 = vadd.f32 %v1807, %v2078
    %v2080 = vpop.f32.mrb[0].mxu0
    %v2081 = vadd.f32 %v1811, %v2080
    %v2082 = vpop.f32.mrb[0].mxu0
    %v2083 = vadd.f32 %v1807, %v2082
    %v2084 = vpop.f32.mrb[0].mxu0
    %v2085 = vadd.f32 %v1811, %v2084
    %2086 = vdwg.mxu0
    %v2087 = vmax.f32 %v2009, 0.0
    %v2088 = vmax.f32 %v2011, 0.0
    %v2089 = vmax.f32 %v2013, 0.0
    %v2090 = vmax.f32 %v2015, 0.0
    %v2091 = vmax.f32 %v2019, 0.0
    %v2092 = vmax.f32 %v2021, 0.0
    %v2093 = vmax.f32 %v2023, 0.0
    %v2094 = vmax.f32 %v2025, 0.0
    %v2095 = vmax.f32 %v2029, 0.0
    %v2096 = vmax.f32 %v2031, 0.0
    %v2097 = vmax.f32 %v2033, 0.0
    %v2098 = vmax.f32 %v2035, 0.0
    %v2099 = vmax.f32 %v2039, 0.0
    %v2100 = vmax.f32 %v2041, 0.0
    %v2101 = vmax.f32 %v2043, 0.0
    %v2102 = vmax.f32 %v2045, 0.0
    %v2103 = vmax.f32 %v2049, 0.0
    %v2104 = vmax.f32 %v2051, 0.0
    %v2105 = vmax.f32 %v2053, 0.0
    %v2106 = vmax.f32 %v2055, 0.0
    %v2107 = vmax.f32 %v2059, 0.0
    %v2108 = vmax.f32 %v2061, 0.0
    %v2109 = vmax.f32 %v2063, 0.0
    %v2110 = vmax.f32 %v2065, 0.0
    %v2111 = vmax.f32 %v2069, 0.0
    %v2112 = vmax.f32 %v2071, 0.0
    %v2113 = vmax.f32 %v2073, 0.0
    %v2114 = vmax.f32 %v2075, 0.0
    %v2115 = vmax.f32 %v2079, 0.0
    %v2116 = vmax.f32 %v2081, 0.0
    %v2117 = vmax.f32 %v2083, 0.0
    %v2118 = vmax.f32 %v2085, 0.0
    %v2119 = vpack.c.bf16 %v2089, %v2087
    %v2120 = vpack.c.bf16 %v2090, %v2088
    %v2121 = vpack.c.bf16 %v2093, %v2091
    %v2122 = vpack.c.bf16 %v2094, %v2092
    %v2123 = vpack.c.bf16 %v2097, %v2095
    %v2124 = vpack.c.bf16 %v2098, %v2096
    %v2125 = vpack.c.bf16 %v2101, %v2099
    %v2126 = vpack.c.bf16 %v2102, %v2100
    %v2127 = vpack.c.bf16 %v2105, %v2103
    %v2128 = vpack.c.bf16 %v2106, %v2104
    %v2129 = vpack.c.bf16 %v2109, %v2107
    %v2130 = vpack.c.bf16 %v2110, %v2108
    %v2131 = vpack.c.bf16 %v2113, %v2111
    %v2132 = vpack.c.bf16 %v2114, %v2112
    %v2133 = vpack.c.bf16 %v2117, %v2115
    %v2134 = vpack.c.bf16 %v2118, %v2116
    %v2135 = vld [vmem:[#allocation17] sm:$0xff]
    %v2136 = vld [vmem:[#allocation17 + $0x8] sm:$0xff]
    %v2137 = vld [vmem:[#allocation17 + $0x10] sm:$0xff]
    %v2138 = vld [vmem:[#allocation17 + $0x18] sm:$0xff]
    %v2139 = vld [vmem:[#allocation17 + $0x20] sm:$0xff]
    %v2140 = vld [vmem:[#allocation17 + $0x28] sm:$0xff]
    %v2141 = vld [vmem:[#allocation17 + $0x30] sm:$0xff]
    %v2142 = vld [vmem:[#allocation17 + $0x38] sm:$0xff]
    %v2143 = vld [vmem:[#allocation17 + $0x40] sm:$0xff]
    %v2144 = vld [vmem:[#allocation17 + $0x48] sm:$0xff]
    %v2145 = vld [vmem:[#allocation17 + $0x50] sm:$0xff]
    %v2146 = vld [vmem:[#allocation17 + $0x58] sm:$0xff]
    %v2147 = vld [vmem:[#allocation17 + $0x60] sm:$0xff]
    %v2148 = vld [vmem:[#allocation17 + $0x68] sm:$0xff]
    %v2149 = vld [vmem:[#allocation17 + $0x70] sm:$0xff]
    %v2150 = vld [vmem:[#allocation17 + $0x78] sm:$0xff]
    %v2151 = vld [vmem:[#allocation17 + $0x80] sm:$0xff]
    %v2152 = vld [vmem:[#allocation17 + $0x88] sm:$0xff]
    %v2153 = vld [vmem:[#allocation17 + $0x90] sm:$0xff]
    %v2154 = vld [vmem:[#allocation17 + $0x98] sm:$0xff]
    %v2155 = vld [vmem:[#allocation17 + $0xa0] sm:$0xff]
    %v2156 = vld [vmem:[#allocation17 + $0xa8] sm:$0xff]
    %v2157 = vld [vmem:[#allocation17 + $0xb0] sm:$0xff]
    %v2158 = vld [vmem:[#allocation17 + $0xb8] sm:$0xff]
    %v2159 = vld [vmem:[#allocation17 + $0xc0] sm:$0xff]
    %v2160 = vld [vmem:[#allocation17 + $0xc8] sm:$0xff]
    %v2161 = vld [vmem:[#allocation17 + $0xd0] sm:$0xff]
    %v2162 = vld [vmem:[#allocation17 + $0xd8] sm:$0xff]
    %v2163 = vld [vmem:[#allocation17 + $0xe0] sm:$0xff]
    %v2164 = vld [vmem:[#allocation17 + $0xe8] sm:$0xff]
    %v2165 = vld [vmem:[#allocation17 + $0xf0] sm:$0xff]
    %v2166 = vld [vmem:[#allocation17 + $0xf8] sm:$0xff]
    %v2167 = vld [vmem:[#allocation19] sm:$0x3]
    %v2169 = vlaneseq
    %v2170 = vshrl.u32 %v2169, 7
    %v2171 = vsub.s32 0, %v2170
    %v2172 = vrot.slane %v2167, %v2171
    %v2173 = vlaneseq
    %v2174 = vshrl.u32 %v2173, 7
    %v2175 = vsub.s32 1, %v2174
    %v2176 = vrot.slane %v2167, %v2175
    %v2211 = vunpack.c.l.b16 %v2135
    %v2212 = vunpack.c.h.b16 %v2135
    %v2213 = vunpack.c.l.b16 %v2136
    %v2214 = vunpack.c.h.b16 %v2136
    %v2215 = vunpack.c.l.b16 %v2137
    %v2216 = vunpack.c.h.b16 %v2137
    %v2217 = vunpack.c.l.b16 %v2138
    %v2218 = vunpack.c.h.b16 %v2138
    %v2219 = vunpack.c.l.b16 %v2139
    %v2220 = vunpack.c.h.b16 %v2139
    %v2221 = vunpack.c.l.b16 %v2140
    %v2222 = vunpack.c.h.b16 %v2140
    %v2223 = vunpack.c.l.b16 %v2141
    %v2224 = vunpack.c.h.b16 %v2141
    %v2225 = vunpack.c.l.b16 %v2142
    %v2226 = vunpack.c.h.b16 %v2142
    %v2227 = vunpack.c.l.b16 %v2143
    %v2228 = vunpack.c.h.b16 %v2143
    %v2229 = vunpack.c.l.b16 %v2144
    %v2230 = vunpack.c.h.b16 %v2144
    %v2231 = vunpack.c.l.b16 %v2145
    %v2232 = vunpack.c.h.b16 %v2145
    %v2233 = vunpack.c.l.b16 %v2146
    %v2234 = vunpack.c.h.b16 %v2146
    %v2235 = vunpack.c.l.b16 %v2147
    %v2236 = vunpack.c.h.b16 %v2147
    %v2237 = vunpack.c.l.b16 %v2148
    %v2238 = vunpack.c.h.b16 %v2148
    %v2239 = vunpack.c.l.b16 %v2149
    %v2240 = vunpack.c.h.b16 %v2149
    %v2241 = vunpack.c.l.b16 %v2150
    %v2242 = vunpack.c.h.b16 %v2150
    %v2243 = vunpack.c.l.b16 %v2151
    %v2244 = vunpack.c.h.b16 %v2151
    %v2245 = vunpack.c.l.b16 %v2152
    %v2246 = vunpack.c.h.b16 %v2152
    %v2247 = vunpack.c.l.b16 %v2153
    %v2248 = vunpack.c.h.b16 %v2153
    %v2249 = vunpack.c.l.b16 %v2154
    %v2250 = vunpack.c.h.b16 %v2154
    %v2251 = vunpack.c.l.b16 %v2155
    %v2252 = vunpack.c.h.b16 %v2155
    %v2253 = vunpack.c.l.b16 %v2156
    %v2254 = vunpack.c.h.b16 %v2156
    %v2255 = vunpack.c.l.b16 %v2157
    %v2256 = vunpack.c.h.b16 %v2157
    %v2257 = vunpack.c.l.b16 %v2158
    %v2258 = vunpack.c.h.b16 %v2158
    %v2259 = vunpack.c.l.b16 %v2159
    %v2260 = vunpack.c.h.b16 %v2159
    %v2261 = vunpack.c.l.b16 %v2160
    %v2262 = vunpack.c.h.b16 %v2160
    %v2263 = vunpack.c.l.b16 %v2161
    %v2264 = vunpack.c.h.b16 %v2161
    %v2265 = vunpack.c.l.b16 %v2162
    %v2266 = vunpack.c.h.b16 %v2162
    %v2267 = vunpack.c.l.b16 %v2163
    %v2268 = vunpack.c.h.b16 %v2163
    %v2269 = vunpack.c.l.b16 %v2164
    %v2270 = vunpack.c.h.b16 %v2164
    %v2271 = vunpack.c.l.b16 %v2165
    %v2272 = vunpack.c.h.b16 %v2165
    %v2273 = vunpack.c.l.b16 %v2166
    %v2274 = vunpack.c.h.b16 %v2166
    %v2275 = vpack.c.b16 %v2213, %v2211
    %v2276 = vpack.c.b16 %v2214, %v2212
    %v2277 = vpack.c.b16 %v2217, %v2215
    %v2278 = vpack.c.b16 %v2218, %v2216
    %v2279 = vpack.c.b16 %v2221, %v2219
    %v2280 = vpack.c.b16 %v2222, %v2220
    %v2281 = vpack.c.b16 %v2225, %v2223
    %v2282 = vpack.c.b16 %v2226, %v2224
    %v2283 = vpack.c.b16 %v2229, %v2227
    %v2284 = vpack.c.b16 %v2230, %v2228
    %v2285 = vpack.c.b16 %v2233, %v2231
    %v2286 = vpack.c.b16 %v2234, %v2232
    %v2287 = vpack.c.b16 %v2237, %v2235
    %v2288 = vpack.c.b16 %v2238, %v2236
    %v2289 = vpack.c.b16 %v2241, %v2239
    %v2290 = vpack.c.b16 %v2242, %v2240
    %v2291 = vpack.c.b16 %v2245, %v2243
    %v2292 = vpack.c.b16 %v2246, %v2244
    %v2293 = vpack.c.b16 %v2249, %v2247
    %v2294 = vpack.c.b16 %v2250, %v2248
    %v2295 = vpack.c.b16 %v2253, %v2251
    %v2296 = vpack.c.b16 %v2254, %v2252
    %v2297 = vpack.c.b16 %v2257, %v2255
    %v2298 = vpack.c.b16 %v2258, %v2256
    %v2299 = vpack.c.b16 %v2261, %v2259
    %v2300 = vpack.c.b16 %v2262, %v2260
    %v2301 = vpack.c.b16 %v2265, %v2263
    %v2302 = vpack.c.b16 %v2266, %v2264
    %v2303 = vpack.c.b16 %v2269, %v2267
    %v2304 = vpack.c.b16 %v2270, %v2268
    %v2305 = vpack.c.b16 %v2273, %v2271
    %v2306 = vpack.c.b16 %v2274, %v2272
    %2339 = vmatprep.subr.bf16.mxu0 %v2276
    %2340 = vmatpush1.bf16.msra.mxu0 %v2275
    %2341 = vmatprep.subr.bf16.mxu0 %v2278
    %2342 = vmatpush1.bf16.msra.mxu0 %v2277
    %2343 = vmatprep.subr.bf16.mxu0 %v2280
    %2344 = vmatpush1.bf16.msra.mxu0 %v2279
    %2345 = vmatprep.subr.bf16.mxu0 %v2282
    %2346 = vmatpush1.bf16.msra.mxu0 %v2281
    %2347 = vmatprep.subr.bf16.mxu0 %v2284
    %2348 = vmatpush1.bf16.msra.mxu0 %v2283
    %2349 = vmatprep.subr.bf16.mxu0 %v2286
    %2350 = vmatpush1.bf16.msra.mxu0 %v2285
    %2351 = vmatprep.subr.bf16.mxu0 %v2288
    %2352 = vmatpush1.bf16.msra.mxu0 %v2287
    %2353 = vmatprep.subr.bf16.mxu0 %v2290
    %2354 = vmatpush1.bf16.msra.mxu0 %v2289
    %2355 = vmatprep.subr.bf16.mxu0 %v2292
    %2356 = vmatpush1.bf16.msra.mxu0 %v2291
    %2357 = vmatprep.subr.bf16.mxu0 %v2294
    %2358 = vmatpush1.bf16.msra.mxu0 %v2293
    %2359 = vmatprep.subr.bf16.mxu0 %v2296
    %2360 = vmatpush1.bf16.msra.mxu0 %v2295
    %2361 = vmatprep.subr.bf16.mxu0 %v2298
    %2362 = vmatpush1.bf16.msra.mxu0 %v2297
    %2363 = vmatprep.subr.bf16.mxu0 %v2300
    %2364 = vmatpush1.bf16.msra.mxu0 %v2299
    %2365 = vmatprep.subr.bf16.mxu0 %v2302
    %2366 = vmatpush1.bf16.msra.mxu0 %v2301
    %2367 = vmatprep.subr.bf16.mxu0 %v2304
    %2368 = vmatpush1.bf16.msra.mxu0 %v2303
    %2369 = vmatprep.subr.bf16.mxu0 %v2306
    %2370 = vmatpush1.bf16.msra.mxu0 %v2305
    %2371 = vmatprep.mubr.bf16.mxu0 %v2120
    %2372 = vmatmul.mubr.bf16.gmra.mrb[0].mxu0 %v2119
    %v2373 = vpop.f32.mrb[0].mxu0
    %v2374 = vadd.f32 %v2172, %v2373
    %v2375 = vpop.f32.mrb[0].mxu0
    %v2376 = vadd.f32 %v2176, %v2375
    %v2377 = vpop.f32.mrb[0].mxu0
    %v2378 = vadd.f32 %v2172, %v2377
    %v2379 = vpop.f32.mrb[0].mxu0
    %v2380 = vadd.f32 %v2176, %v2379
    %2381 = vmatprep.mubr.bf16.mxu0 %v2122
    %2382 = vmatmul.mubr.bf16.gmra.mrb[0].mxu0 %v2121
    %v2383 = vpop.f32.mrb[0].mxu0
    %v2384 = vadd.f32 %v2172, %v2383
    %v2385 = vpop.f32.mrb[0].mxu0
    %v2386 = vadd.f32 %v2176, %v2385
    %v2387 = vpop.f32.mrb[0].mxu0
    %v2388 = vadd.f32 %v2172, %v2387
    %v2389 = vpop.f32.mrb[0].mxu0
    %v2390 = vadd.f32 %v2176, %v2389
    %2391 = vmatprep.mubr.bf16.mxu0 %v2124
    %2392 = vmatmul.mubr.bf16.gmra.mrb[0].mxu0 %v2123
    %v2393 = vpop.f32.mrb[0].mxu0
    %v2394 = vadd.f32 %v2172, %v2393
    %v2395 = vpop.f32.mrb[0].mxu0
    %v2396 = vadd.f32 %v2176, %v2395
    %v2397 = vpop.f32.mrb[0].mxu0
    %v2398 = vadd.f32 %v2172, %v2397
    %v2399 = vpop.f32.mrb[0].mxu0
    %v2400 = vadd.f32 %v2176, %v2399
    %2401 = vmatprep.mubr.bf16.mxu0 %v2126
    %2402 = vmatmul.mubr.bf16.gmra.mrb[0].mxu0 %v2125
    %v2403 = vpop.f32.mrb[0].mxu0
    %v2404 = vadd.f32 %v2172, %v2403
    %v2405 = vpop.f32.mrb[0].mxu0
    %v2406 = vadd.f32 %v2176, %v2405
    %v2407 = vpop.f32.mrb[0].mxu0
    %v2408 = vadd.f32 %v2172, %v2407
    %v2409 = vpop.f32.mrb[0].mxu0
    %v2410 = vadd.f32 %v2176, %v2409
    %2411 = vmatprep.mubr.bf16.mxu0 %v2128
    %2412 = vmatmul.mubr.bf16.gmra.mrb[0].mxu0 %v2127
    %v2413 = vpop.f32.mrb[0].mxu0
    %v2414 = vadd.f32 %v2172, %v2413
    %v2415 = vpop.f32.mrb[0].mxu0
    %v2416 = vadd.f32 %v2176, %v2415
    %v2417 = vpop.f32.mrb[0].mxu0
    %v2418 = vadd.f32 %v2172, %v2417
    %v2419 = vpop.f32.mrb[0].mxu0
    %v2420 = vadd.f32 %v2176, %v2419
    %2421 = vmatprep.mubr.bf16.mxu0 %v2130
    %2422 = vmatmul.mubr.bf16.gmra.mrb[0].mxu0 %v2129
    %v2423 = vpop.f32.mrb[0].mxu0
    %v2424 = vadd.f32 %v2172, %v2423
    %v2425 = vpop.f32.mrb[0].mxu0
    %v2426 = vadd.f32 %v2176, %v2425
    %v2427 = vpop.f32.mrb[0].mxu0
    %v2428 = vadd.f32 %v2172, %v2427
    %v2429 = vpop.f32.mrb[0].mxu0
    %v2430 = vadd.f32 %v2176, %v2429
    %2431 = vmatprep.mubr.bf16.mxu0 %v2132
    %2432 = vmatmul.mubr.bf16.gmra.mrb[0].mxu0 %v2131
    %v2433 = vpop.f32.mrb[0].mxu0
    %v2434 = vadd.f32 %v2172, %v2433
    %v2435 = vpop.f32.mrb[0].mxu0
    %v2436 = vadd.f32 %v2176, %v2435
    %v2437 = vpop.f32.mrb[0].mxu0
    %v2438 = vadd.f32 %v2172, %v2437
    %v2439 = vpop.f32.mrb[0].mxu0
    %v2440 = vadd.f32 %v2176, %v2439
    %2441 = vmatprep.mubr.bf16.mxu0 %v2134
    %2442 = vmatmul.mubr.bf16.gmra.mrb[0].mxu0 %v2133
    %v2443 = vpop.f32.mrb[0].mxu0
    %v2444 = vadd.f32 %v2172, %v2443
    %v2445 = vpop.f32.mrb[0].mxu0
    %v2446 = vadd.f32 %v2176, %v2445
    %v2447 = vpop.f32.mrb[0].mxu0
    %v2448 = vadd.f32 %v2172, %v2447
    %v2449 = vpop.f32.mrb[0].mxu0
    %v2450 = vadd.f32 %v2176, %v2449
    %2451 = vdwg.mxu0
    %2452 = vst [vmem:[#allocation20] sm:$0xff] %v2374
    %2453 = vst [vmem:[#allocation20 + $0x8] sm:$0xff] %v2376
    %2454 = vst [vmem:[#allocation20 + $0x10] sm:$0xff] %v2378
    %2455 = vst [vmem:[#allocation20 + $0x18] sm:$0xff] %v2380
    %2456 = vst [vmem:[#allocation20 + $0x20] sm:$0xff] %v2384
    %2457 = vst [vmem:[#allocation20 + $0x28] sm:$0xff] %v2386
    %2458 = vst [vmem:[#allocation20 + $0x30] sm:$0xff] %v2388
    %2459 = vst [vmem:[#allocation20 + $0x38] sm:$0xff] %v2390
    %2460 = vst [vmem:[#allocation20 + $0x40] sm:$0xff] %v2394
    %2461 = vst [vmem:[#allocation20 + $0x48] sm:$0xff] %v2396
    %2462 = vst [vmem:[#allocation20 + $0x50] sm:$0xff] %v2398
    %2463 = vst [vmem:[#allocation20 + $0x58] sm:$0xff] %v2400
    %2464 = vst [vmem:[#allocation20 + $0x60] sm:$0xff] %v2404
    %2465 = vst [vmem:[#allocation20 + $0x68] sm:$0xff] %v2406
    %2466 = vst [vmem:[#allocation20 + $0x70] sm:$0xff] %v2408
    %2467 = vst [vmem:[#allocation20 + $0x78] sm:$0xff] %v2410
    %2468 = vst [vmem:[#allocation20 + $0x80] sm:$0xff] %v2414
    %2469 = vst [vmem:[#allocation20 + $0x88] sm:$0xff] %v2416
    %2470 = vst [vmem:[#allocation20 + $0x90] sm:$0xff] %v2418
    %2471 = vst [vmem:[#allocation20 + $0x98] sm:$0xff] %v2420
    %2472 = vst [vmem:[#allocation20 + $0xa0] sm:$0xff] %v2424
    %2473 = vst [vmem:[#allocation20 + $0xa8] sm:$0xff] %v2426
    %2474 = vst [vmem:[#allocation20 + $0xb0] sm:$0xff] %v2428
    %2475 = vst [vmem:[#allocation20 + $0xb8] sm:$0xff] %v2430
    %2476 = vst [vmem:[#allocation20 + $0xc0] sm:$0xff] %v2434
    %2477 = vst [vmem:[#allocation20 + $0xc8] sm:$0xff] %v2436
    %2478 = vst [vmem:[#allocation20 + $0xd0] sm:$0xff] %v2438
    %2479 = vst [vmem:[#allocation20 + $0xd8] sm:$0xff] %v2440
    %2480 = vst [vmem:[#allocation20 + $0xe0] sm:$0xff] %v2444
    %2481 = vst [vmem:[#allocation20 + $0xe8] sm:$0xff] %v2446
    %2482 = vst [vmem:[#allocation20 + $0xf0] sm:$0xff] %v2448
    %2483 = vst [vmem:[#allocation20 + $0xf8] sm:$0xff] %v2450
    // Predicated region
    $region90: #{bloom_mlp_forward.1} parent=1 // pred_check
      _
    $region91: #{bloom_mlp_forward.1} parent=1 // pred_check_branch
      %2485 = sbr.rel (0) target = $region93
    $region92: #{bloom_mlp_forward.1} parent=1 // pred_region
      %s2487 = ssub.s32 4096, 4096
      %2488 = vsyncadd [#allocation4], %s2487
      %s2489 = sshll.u32 [#allocation20], 4
      %s2490 = int_to_ptr.vmem [resolvable:$true] %s2489
      %2495 = dma.vmem_to_hbm [thread:$0]  %s2490, 4096, %s11, [#allocation4], 256, 256, 16
    $region93: #{bloom_mlp_forward.1} parent=1 // pred_fallthru
      _
    // Predicated region
    $region94: #{bloom_mlp_forward.1} parent=1 // pred_check
      _
    $region95: #{bloom_mlp_forward.1} parent=1 // pred_check_branch
      %2497 = sbr.rel (0) target = $region97
    $region96: #{bloom_mlp_forward.1} parent=1 // pred_region
      %2498 = dma.done [#allocation4], 4096
    $region97: #{bloom_mlp_forward.1} parent=1 // pred_fallthru
      _
    %2499 = vsyncpa [#allocation3], 1
    %2500 = vsyncpa [#allocation6], 1
    %2501 = vsyncpa [#allocation9], 1
    %2502 = vsyncpa [#allocation12], 1
    %2503 = vsyncpa [#allocation15], 1
    %2504 = vsyncpa [#allocation18], 1
    %2505 = vsyncpa [#allocation4], 1

</llo_original>
